<compile_context>
chip_gen: v6e
topology: v6e:2x2x1
jax: 0.10.0
libtpu: 0.0.40
codegen_flags: <defaults>
</compile_context>

<pallas_src>
from functools import partial

import jax
import jax.numpy as jnp
from jax.experimental import pallas as pl
from jax.experimental.pallas import tpu as pltpu


def mha_hyper_kernel(num_heads, head_dim, k_dim,
                     x_ref, wqkv_ref, bqkv_ref, w0b_ref, w1b_ref, seg_ref,
                     wp_ref, bp_ref, o_ref):
    """One grid step == one batch element.

    x_ref  : (1, N, C)
    wqkv   : (C, 3D) = [wq | wk | wv]        bqkv : (1, 3D)
    w0b    : (D, H*k)   = kron(I_H, linear_0.weight.T)
    w1b    : (H*k, D)   = kron(I_H, linear_1.weight.T)
    seg    : (2*H*k, 2*H*k) = kron(I_{2H}, ones(k, k))  (segmented row-sum)
    wp     : (D, C) = proj.weight.T           bp  : (1, C)
    o_ref  : (1, N, C)
    """
    x = x_ref[0]                                  # (N, C)
    D = num_heads * head_dim
    Hk = num_heads * k_dim

    # --- fused QKV projection: one MXU matmul -------------------------------
    qkv = jnp.dot(x, wqkv_ref[...],
                  preferred_element_type=jnp.float32) + bqkv_ref[...]   # (N, 3D)
    q_all = qkv[:, :D]                                                  # (N, D)

    # --- attn1 logits for all heads in one matmul (block-diag w0) -----------
    a1_log = jnp.dot(q_all, w0b_ref[...],
                     preferred_element_type=jnp.float32)                # (N, H*k)

    # --- attn2 logits per head (Q_h K_h^T), lane-concatenated ---------------
    a2_parts = []
    for h in range(num_heads):
        lo = h * head_dim
        qh = qkv[:, lo:lo + head_dim]                                   # (N, Dh)
        kh = qkv[:, D + lo:D + lo + head_dim]                           # (N, Dh)
        a2_parts.append(jnp.dot(qh, kh.T,
                                preferred_element_type=jnp.float32))    # (N, N)
    a2_log = jnp.concatenate(a2_parts, axis=-1)                         # (N, H*N)

    # --- one dense softmax (dim=-2 is column-independent) over both paths ---
    logits = jnp.concatenate([a1_log, a2_log], axis=-1)                 # (N, 2*H*k)
    m = jnp.max(logits, axis=0, keepdims=True)
    e = jnp.exp(logits - m)
    s = e * pl.reciprocal(jnp.sum(e, axis=0, keepdims=True), approx=False)

    # segmented row-norm: block-diag ones matmul gives per-head row sums,
    # already broadcast across each head's k lanes.
    row_sums = jnp.dot(s, seg_ref[...], preferred_element_type=jnp.float32)
    a = s * pl.reciprocal(1e-9 + row_sums, approx=False)                # (N, 2*H*k)

    a1 = a[:, :Hk]                                                      # (N, H*k)
    a2 = a[:, Hk:]                                                      # (N, H*k)

    # --- out1 + out2 for all heads: one matmul, head-ordered (N, D) ---------
    out12 = jnp.dot(a1 + a2, w1b_ref[...],
                    preferred_element_type=jnp.float32)                 # (N, D)

    # --- out3 per head: a1_h @ V_h ------------------------------------------
    out3_parts = []
    for h in range(num_heads):
        a1h = a1[:, h * k_dim:(h + 1) * k_dim]                          # (N, k)
        vh = qkv[:, 2 * D + h * head_dim:2 * D + (h + 1) * head_dim]    # (N, Dh)
        out3_parts.append(jnp.dot(a1h, vh,
                                  preferred_element_type=jnp.float32))  # (N, Dh)
    out3 = jnp.concatenate(out3_parts, axis=-1)                         # (N, D)

    # --- output projection, residual, ReLU ----------------------------------
    out_all = out12 + out3
    proj = jnp.dot(out_all, wp_ref[...],
                   preferred_element_type=jnp.float32) + bp_ref[...]    # (N, C)
    o_ref[0] = jnp.maximum(x + proj, 0.0).astype(o_ref.dtype)
    # TODO(synk): attn_drop / proj_drop are p=0.0 (identity) and self.layernorm
    # is never used in forward(); intentionally omitted.


def multihead_hyper_attention(x, params, num_heads):
    B, N, C = x.shape
    D = params["wq"].shape[1]
    assert D % num_heads == 0
    Dh = D // num_heads
    k = params["w0"].shape[1]
    assert k == N, "num_nodes (k) must equal sequence length N (required by the module)"

    # Wrapper-side weight packing (done once; free under jit).
    wqkv = jnp.concatenate([params["wq"], params["wk"], params["wv"]], axis=1)  # (C, 3D)
    bqkv = jnp.concatenate([params["bq"], params["bk"], params["bv"]], axis=1)  # (1, 3D)
    eye_h = jnp.eye(num_heads, dtype=jnp.float32)
    w0_big = jnp.kron(eye_h, params["w0"])                                      # (D, H*k)
    w1_big = jnp.kron(eye_h, params["w1"])                                      # (H*k, D)
    seg_ones = jnp.kron(jnp.eye(2 * num_heads, dtype=jnp.float32),
                        jnp.ones((k, k), jnp.float32))                          # (2Hk, 2Hk)

    def full_spec(a):
        nd = a.ndim
        return pl.BlockSpec(a.shape, lambda b, _nd=nd: (0,) * _nd)

    kernel = partial(mha_hyper_kernel, num_heads, Dh, k)

    return pl.pallas_call(
        kernel,
        out_shape=jax.ShapeDtypeStruct((B, N, C), x.dtype),
        grid=(B,),
        in_specs=[
            pl.BlockSpec((1, N, C), lambda b: (b, 0, 0)),   # x
            full_spec(wqkv), full_spec(bqkv),
            full_spec(w0_big), full_spec(w1_big), full_spec(seg_ones),
            full_spec(params["wp"]), full_spec(params["bp"]),
        ],
        out_specs=pl.BlockSpec((1, N, C), lambda b: (b, 0, 0)),
        compiler_params=pltpu.CompilerParams(dimension_semantics=("parallel",)),
    )(x, wqkv, bqkv, w0_big, w1_big, seg_ones, params["wp"], params["bp"])


def reference(x, params, num_heads):
    """Pure-JAX replica of the PyTorch forward (dropout p=0, layernorm unused)."""
    B, N, C = x.shape
    D = params["wq"].shape[1]
    Dh = D // num_heads

    def heads(t):  # (B,N,D) -> (B,H,N,Dh)
        return t.reshape(B, N, num_heads, Dh).transpose(0, 2, 1, 3)

    Q = heads(x @ params["wq"] + params["bq"])
    K = heads(x @ params["wk"] + params["bk"])
    V = heads(x @ params["wv"] + params["bv"])

    def sm_norm(a):
        a = jax.nn.softmax(a, axis=-2)
        return a / (1e-9 + a.sum(-1, keepdims=True))

    attn1 = sm_norm(Q @ params["w0"])
    out1 = (attn1 @ params["w1"]).transpose(0, 2, 1, 3).reshape(B, N, D)
    attn2 = sm_norm(Q @ K.transpose(0, 1, 3, 2))
    out2 = (attn2 @ params["w1"]).transpose(0, 2, 1, 3).reshape(B, N, D)
    attn3 = sm_norm(Q @ params["w0"])
    out3 = (attn3 @ V).transpose(0, 2, 1, 3).reshape(B, N, D)

    out = (out1 + out2 + out3) @ params["wp"] + params["bp"]
    return jax.nn.relu(x + out)


if __name__ == "__main__":
    # Shapes consistent with the module: num_nodes = N = k = 16, in_dim = 32,
    # att_dim = 64, num_heads = 4 (64 % 4 == 0), batch = 2.
    B, N, C = 2, 16, 32
    D, H = 64, 4
    k = N  # self.k = num_nodes; forward requires k == N

    key = jax.random.PRNGKey(0)
    ks = jax.random.split(key, 12)
    scale = 0.1
    params = {
        "wq": scale * jax.random.normal(ks[0], (C, D), jnp.float32),
        "bq": scale * jax.random.normal(ks[1], (1, D), jnp.float32),
        "wk": scale * jax.random.normal(ks[2], (C, D), jnp.float32),
        "bk": scale * jax.random.normal(ks[3], (1, D), jnp.float32),
        "wv": scale * jax.random.normal(ks[4], (C, D), jnp.float32),
        "bv": scale * jax.random.normal(ks[5], (1, D), jnp.float32),
        "w0": scale * jax.random.normal(ks[6], (D // H, k), jnp.float32),  # linear_0 (no bias)
        "w1": scale * jax.random.normal(ks[7], (k, D // H), jnp.float32),  # linear_1 (no bias)
        "wp": scale * jax.random.normal(ks[8], (D, C), jnp.float32),       # proj
        "bp": scale * jax.random.normal(ks[9], (1, C), jnp.float32),
    }
    x = jax.random.normal(ks[10], (B, N, C), jnp.float32)

    out = multihead_hyper_attention(x, params, num_heads=H)
    out = jax.block_until_ready(out)

    ref = reference(x, params, num_heads=H)
    assert out.shape == (B, N, C)
    assert jnp.allclose(out, ref, atol=1e-4, rtol=1e-4), (
        f"max abs err {jnp.max(jnp.abs(out - ref))}")

    print("KERNEL_OK")
</pallas_src>

<mosaic_0001>
module attributes {stable_mosaic.version = 11 : i64} {
  func.func @mha_hyper_kernel(%arg0: i32, %arg1: memref<1x16x32xf32, #tpu.memory_space<vmem>>, %arg2: memref<32x192xf32, #tpu.memory_space<vmem>>, %arg3: memref<1x192xf32, #tpu.memory_space<vmem>>, %arg4: memref<64x64xf32, #tpu.memory_space<vmem>>, %arg5: memref<64x64xf32, #tpu.memory_space<vmem>>, %arg6: memref<128x128xf32, #tpu.memory_space<vmem>>, %arg7: memref<64x32xf32, #tpu.memory_space<vmem>>, %arg8: memref<1x32xf32, #tpu.memory_space<vmem>>, %arg9: memref<1x16x32xf32, #tpu.memory_space<vmem>>) attributes {dimension_semantics = [#tpu.dimension_semantics<parallel>], iteration_bounds = array<i64: 2>, scalar_prefetch = 0 : i64, scratch_operands = 0 : i64, tpu.core_type = #tpu.core_type<tc>, window_params = [{transform_indices = @transform_0, window_bounds = array<i64: 1, 16, 32>}, {pipeline_mode = #tpu.pipeline_mode<synchronous>, transform_indices = @transform_1, window_bounds = array<i64: 32, 192>}, {pipeline_mode = #tpu.pipeline_mode<synchronous>, transform_indices = @transform_2, window_bounds = array<i64: 1, 192>}, {pipeline_mode = #tpu.pipeline_mode<synchronous>, transform_indices = @transform_3, window_bounds = array<i64: 64, 64>}, {pipeline_mode = #tpu.pipeline_mode<synchronous>, transform_indices = @transform_4, window_bounds = array<i64: 64, 64>}, {pipeline_mode = #tpu.pipeline_mode<synchronous>, transform_indices = @transform_5, window_bounds = array<i64: 128, 128>}, {pipeline_mode = #tpu.pipeline_mode<synchronous>, transform_indices = @transform_6, window_bounds = array<i64: 64, 32>}, {pipeline_mode = #tpu.pipeline_mode<synchronous>, transform_indices = @transform_7, window_bounds = array<i64: 1, 32>}, {transform_indices = @transform_8, window_bounds = array<i64: 1, 16, 32>}]} {
    %c0 = arith.constant 0 : index
    %c0_0 = arith.constant 0 : index
    %c0_1 = arith.constant 0 : index
    %0 = vector.load %arg1[%c0, %c0_0, %c0_1] : memref<1x16x32xf32, #tpu.memory_space<vmem>>, vector<1x16x32xf32>
    %1 = vector.shape_cast %0 : vector<1x16x32xf32> to vector<16x32xf32>
    %c0_2 = arith.constant 0 : index
    %c0_3 = arith.constant 0 : index
    %2 = vector.load %arg2[%c0_2, %c0_3] : memref<32x192xf32, #tpu.memory_space<vmem>>, vector<32x192xf32>
    %cst = arith.constant dense<0.000000e+00> : vector<16x192xf32>
    %3 = tpu.matmul %1, %2, %cst {dimension_numbers = #tpu.dot_dimension_numbers<[1], [0], [0], [1], [0, 0, 1, 1], [], []>} : vector<16x32xf32>, vector<32x192xf32>, vector<16x192xf32> -> vector<16x192xf32>
    %c0_4 = arith.constant 0 : index
    %c0_5 = arith.constant 0 : index
    %4 = vector.load %arg3[%c0_4, %c0_5] : memref<1x192xf32, #tpu.memory_space<vmem>>, vector<1x192xf32>
    %5 = vector.broadcast %4 : vector<1x192xf32> to vector<16x192xf32>
    %6 = arith.addf %3, %5 : vector<16x192xf32>
    %7 = vector.extract_strided_slice %6 {offsets = [0, 0], sizes = [16, 64], strides = [1, 1]} : vector<16x192xf32> to vector<16x64xf32>
    %c0_6 = arith.constant 0 : index
    %c0_7 = arith.constant 0 : index
    %8 = vector.load %arg4[%c0_6, %c0_7] : memref<64x64xf32, #tpu.memory_space<vmem>>, vector<64x64xf32>
    %cst_8 = arith.constant dense<0.000000e+00> : vector<16x64xf32>
    %9 = tpu.matmul %7, %8, %cst_8 {dimension_numbers = #tpu.dot_dimension_numbers<[1], [0], [0], [1], [0, 0, 1, 1], [], []>} : vector<16x64xf32>, vector<64x64xf32>, vector<16x64xf32> -> vector<16x64xf32>
    %10 = vector.extract_strided_slice %6 {offsets = [0, 0], sizes = [16, 16], strides = [1, 1]} : vector<16x192xf32> to vector<16x16xf32>
    %11 = vector.extract_strided_slice %6 {offsets = [0, 64], sizes = [16, 16], strides = [1, 1]} : vector<16x192xf32> to vector<16x16xf32>
    %12 = tpu.transpose %11, [1, 0] : vector<16x16xf32> -> vector<16x16xf32>
    %cst_9 = arith.constant dense<0.000000e+00> : vector<16x16xf32>
    %13 = tpu.matmul %10, %12, %cst_9 {dimension_numbers = #tpu.dot_dimension_numbers<[1], [0], [0], [1], [0, 0, 1, 1], [], []>} : vector<16x16xf32>, vector<16x16xf32>, vector<16x16xf32> -> vector<16x16xf32>
    %14 = vector.extract_strided_slice %6 {offsets = [0, 16], sizes = [16, 16], strides = [1, 1]} : vector<16x192xf32> to vector<16x16xf32>
    %15 = vector.extract_strided_slice %6 {offsets = [0, 80], sizes = [16, 16], strides = [1, 1]} : vector<16x192xf32> to vector<16x16xf32>
    %16 = tpu.transpose %15, [1, 0] : vector<16x16xf32> -> vector<16x16xf32>
    %cst_10 = arith.constant dense<0.000000e+00> : vector<16x16xf32>
    %17 = tpu.matmul %14, %16, %cst_10 {dimension_numbers = #tpu.dot_dimension_numbers<[1], [0], [0], [1], [0, 0, 1, 1], [], []>} : vector<16x16xf32>, vector<16x16xf32>, vector<16x16xf32> -> vector<16x16xf32>
    %18 = vector.extract_strided_slice %6 {offsets = [0, 32], sizes = [16, 16], strides = [1, 1]} : vector<16x192xf32> to vector<16x16xf32>
    %19 = vector.extract_strided_slice %6 {offsets = [0, 96], sizes = [16, 16], strides = [1, 1]} : vector<16x192xf32> to vector<16x16xf32>
    %20 = tpu.transpose %19, [1, 0] : vector<16x16xf32> -> vector<16x16xf32>
    %cst_11 = arith.constant dense<0.000000e+00> : vector<16x16xf32>
    %21 = tpu.matmul %18, %20, %cst_11 {dimension_numbers = #tpu.dot_dimension_numbers<[1], [0], [0], [1], [0, 0, 1, 1], [], []>} : vector<16x16xf32>, vector<16x16xf32>, vector<16x16xf32> -> vector<16x16xf32>
    %22 = vector.extract_strided_slice %6 {offsets = [0, 48], sizes = [16, 16], strides = [1, 1]} : vector<16x192xf32> to vector<16x16xf32>
    %23 = vector.extract_strided_slice %6 {offsets = [0, 112], sizes = [16, 16], strides = [1, 1]} : vector<16x192xf32> to vector<16x16xf32>
    %24 = tpu.transpose %23, [1, 0] : vector<16x16xf32> -> vector<16x16xf32>
    %cst_12 = arith.constant dense<0.000000e+00> : vector<16x16xf32>
    %25 = tpu.matmul %22, %24, %cst_12 {dimension_numbers = #tpu.dot_dimension_numbers<[1], [0], [0], [1], [0, 0, 1, 1], [], []>} : vector<16x16xf32>, vector<16x16xf32>, vector<16x16xf32> -> vector<16x16xf32>
    %26 = tpu.concatenate %13, %17, %21, %25 in 1 : vector<16x16xf32>, vector<16x16xf32>, vector<16x16xf32>, vector<16x16xf32> -> vector<16x64xf32>
    %27 = tpu.concatenate %9, %26 in 1 : vector<16x64xf32>, vector<16x64xf32> -> vector<16x128xf32>
    %cst_13 = arith.constant dense<0xFF800000> : vector<128xf32>
    %28 = vector.multi_reduction <maximumf>, %27, %cst_13 [0] : vector<16x128xf32> to vector<128xf32>
    %29 = vector.shape_cast %28 : vector<128xf32> to vector<1x128xf32>
    %30 = vector.broadcast %29 : vector<1x128xf32> to vector<16x128xf32>
    %31 = arith.subf %27, %30 : vector<16x128xf32>
    %32 = math.exp %31 : vector<16x128xf32>
    %cst_14 = arith.constant dense<0.000000e+00> : vector<128xf32>
    %33 = vector.multi_reduction <add>, %32, %cst_14 [0] : vector<16x128xf32> to vector<128xf32>
    %34 = vector.shape_cast %33 : vector<128xf32> to vector<1x128xf32>
    %35 = tpu.reciprocal %34 : vector<1x128xf32> -> vector<1x128xf32>
    %36 = vector.broadcast %35 : vector<1x128xf32> to vector<16x128xf32>
    %37 = arith.mulf %32, %36 : vector<16x128xf32>
    %c0_15 = arith.constant 0 : index
    %c0_16 = arith.constant 0 : index
    %38 = vector.load %arg6[%c0_15, %c0_16] : memref<128x128xf32, #tpu.memory_space<vmem>>, vector<128x128xf32>
    %cst_17 = arith.constant dense<0.000000e+00> : vector<16x128xf32>
    %39 = tpu.matmul %37, %38, %cst_17 {dimension_numbers = #tpu.dot_dimension_numbers<[1], [0], [0], [1], [0, 0, 1, 1], [], []>} : vector<16x128xf32>, vector<128x128xf32>, vector<16x128xf32> -> vector<16x128xf32>
    %cst_18 = arith.constant 9.99999971E-10 : f32
    %40 = vector.broadcast %cst_18 : f32 to vector<16x128xf32>
    %41 = arith.addf %40, %39 : vector<16x128xf32>
    %42 = tpu.reciprocal %41 : vector<16x128xf32> -> vector<16x128xf32>
    %43 = arith.mulf %37, %42 : vector<16x128xf32>
    %44 = vector.extract_strided_slice %43 {offsets = [0, 0], sizes = [16, 64], strides = [1, 1]} : vector<16x128xf32> to vector<16x64xf32>
    %45 = vector.extract_strided_slice %43 {offsets = [0, 64], sizes = [16, 64], strides = [1, 1]} : vector<16x128xf32> to vector<16x64xf32>
    %46 = arith.addf %44, %45 : vector<16x64xf32>
    %c0_19 = arith.constant 0 : index
    %c0_20 = arith.constant 0 : index
    %47 = vector.load %arg5[%c0_19, %c0_20] : memref<64x64xf32, #tpu.memory_space<vmem>>, vector<64x64xf32>
    %cst_21 = arith.constant dense<0.000000e+00> : vector<16x64xf32>
    %48 = tpu.matmul %46, %47, %cst_21 {dimension_numbers = #tpu.dot_dimension_numbers<[1], [0], [0], [1], [0, 0, 1, 1], [], []>} : vector<16x64xf32>, vector<64x64xf32>, vector<16x64xf32> -> vector<16x64xf32>
    %49 = vector.extract_strided_slice %44 {offsets = [0, 0], sizes = [16, 16], strides = [1, 1]} : vector<16x64xf32> to vector<16x16xf32>
    %50 = vector.extract_strided_slice %6 {offsets = [0, 128], sizes = [16, 16], strides = [1, 1]} : vector<16x192xf32> to vector<16x16xf32>
    %cst_22 = arith.constant dense<0.000000e+00> : vector<16x16xf32>
    %51 = tpu.matmul %49, %50, %cst_22 {dimension_numbers = #tpu.dot_dimension_numbers<[1], [0], [0], [1], [0, 0, 1, 1], [], []>} : vector<16x16xf32>, vector<16x16xf32>, vector<16x16xf32> -> vector<16x16xf32>
    %52 = vector.extract_strided_slice %44 {offsets = [0, 16], sizes = [16, 16], strides = [1, 1]} : vector<16x64xf32> to vector<16x16xf32>
    %53 = vector.extract_strided_slice %6 {offsets = [0, 144], sizes = [16, 16], strides = [1, 1]} : vector<16x192xf32> to vector<16x16xf32>
    %cst_23 = arith.constant dense<0.000000e+00> : vector<16x16xf32>
    %54 = tpu.matmul %52, %53, %cst_23 {dimension_numbers = #tpu.dot_dimension_numbers<[1], [0], [0], [1], [0, 0, 1, 1], [], []>} : vector<16x16xf32>, vector<16x16xf32>, vector<16x16xf32> -> vector<16x16xf32>
    %55 = vector.extract_strided_slice %44 {offsets = [0, 32], sizes = [16, 16], strides = [1, 1]} : vector<16x64xf32> to vector<16x16xf32>
    %56 = vector.extract_strided_slice %6 {offsets = [0, 160], sizes = [16, 16], strides = [1, 1]} : vector<16x192xf32> to vector<16x16xf32>
    %cst_24 = arith.constant dense<0.000000e+00> : vector<16x16xf32>
    %57 = tpu.matmul %55, %56, %cst_24 {dimension_numbers = #tpu.dot_dimension_numbers<[1], [0], [0], [1], [0, 0, 1, 1], [], []>} : vector<16x16xf32>, vector<16x16xf32>, vector<16x16xf32> -> vector<16x16xf32>
    %58 = vector.extract_strided_slice %44 {offsets = [0, 48], sizes = [16, 16], strides = [1, 1]} : vector<16x64xf32> to vector<16x16xf32>
    %59 = vector.extract_strided_slice %6 {offsets = [0, 176], sizes = [16, 16], strides = [1, 1]} : vector<16x192xf32> to vector<16x16xf32>
    %cst_25 = arith.constant dense<0.000000e+00> : vector<16x16xf32>
    %60 = tpu.matmul %58, %59, %cst_25 {dimension_numbers = #tpu.dot_dimension_numbers<[1], [0], [0], [1], [0, 0, 1, 1], [], []>} : vector<16x16xf32>, vector<16x16xf32>, vector<16x16xf32> -> vector<16x16xf32>
    %61 = tpu.concatenate %51, %54, %57, %60 in 1 : vector<16x16xf32>, vector<16x16xf32>, vector<16x16xf32>, vector<16x16xf32> -> vector<16x64xf32>
    %62 = arith.addf %48, %61 : vector<16x64xf32>
    %c0_26 = arith.constant 0 : index
    %c0_27 = arith.constant 0 : index
    %63 = vector.load %arg7[%c0_26, %c0_27] : memref<64x32xf32, #tpu.memory_space<vmem>>, vector<64x32xf32>
    %cst_28 = arith.constant dense<0.000000e+00> : vector<16x32xf32>
    %64 = tpu.matmul %62, %63, %cst_28 {dimension_numbers = #tpu.dot_dimension_numbers<[1], [0], [0], [1], [0, 0, 1, 1], [], []>} : vector<16x64xf32>, vector<64x32xf32>, vector<16x32xf32> -> vector<16x32xf32>
    %c0_29 = arith.constant 0 : index
    %c0_30 = arith.constant 0 : index
    %65 = vector.load %arg8[%c0_29, %c0_30] : memref<1x32xf32, #tpu.memory_space<vmem>>, vector<1x32xf32>
    %66 = vector.broadcast %65 : vector<1x32xf32> to vector<16x32xf32>
    %67 = arith.addf %64, %66 : vector<16x32xf32>
    %68 = arith.addf %1, %67 : vector<16x32xf32>
    %cst_31 = arith.constant 0.000000e+00 : f32
    %69 = vector.broadcast %cst_31 : f32 to vector<16x32xf32>
    %70 = arith.maximumf %68, %69 : vector<16x32xf32>
    %c0_32 = arith.constant 0 : index
    %c0_33 = arith.constant 0 : index
    %c0_34 = arith.constant 0 : index
    %71 = vector.load %arg9[%c0_32, %c0_33, %c0_34] : memref<1x16x32xf32, #tpu.memory_space<vmem>>, vector<1x16x32xf32>
    %72 = vector.shape_cast %71 : vector<1x16x32xf32> to vector<16x32xf32>
    %73 = vector.shape_cast %70 : vector<16x32xf32> to vector<1x16x32xf32>
    tpu.vector_store %arg9[%c0_32, %c0_33, %c0_34], %73 {strides = array<i32>} : memref<1x16x32xf32, #tpu.memory_space<vmem>>, vector<1x16x32xf32>,
    return
  }
  func.func @transform_0(%arg0: i32) -> (i32, i32, i32) {
    %c0_i32 = arith.constant 0 : i32
    %c0_i32_0 = arith.constant 0 : i32
    %c0_i32_1 = arith.constant 0 : i32
    return %arg0, %c0_i32, %c0_i32_0 : i32, i32, i32
  }
  func.func @transform_1(%arg0: i32) -> (i32, i32) {
    %c0_i32 = arith.constant 0 : i32
    %c0_i32_0 = arith.constant 0 : i32
    %c0_i32_1 = arith.constant 0 : i32
    return %c0_i32, %c0_i32_0 : i32, i32
  }
  func.func @transform_2(%arg0: i32) -> (i32, i32) {
    %c0_i32 = arith.constant 0 : i32
    %c0_i32_0 = arith.constant 0 : i32
    %c0_i32_1 = arith.constant 0 : i32
    return %c0_i32, %c0_i32_0 : i32, i32
  }
  func.func @transform_3(%arg0: i32) -> (i32, i32) {
    %c0_i32 = arith.constant 0 : i32
    %c0_i32_0 = arith.constant 0 : i32
    %c0_i32_1 = arith.constant 0 : i32
    return %c0_i32, %c0_i32_0 : i32, i32
  }
  func.func @transform_4(%arg0: i32) -> (i32, i32) {
    %c0_i32 = arith.constant 0 : i32
    %c0_i32_0 = arith.constant 0 : i32
    %c0_i32_1 = arith.constant 0 : i32
    return %c0_i32, %c0_i32_0 : i32, i32
  }
  func.func @transform_5(%arg0: i32) -> (i32, i32) {
    %c0_i32 = arith.constant 0 : i32
    %c0_i32_0 = arith.constant 0 : i32
    %c0_i32_1 = arith.constant 0 : i32
    return %c0_i32, %c0_i32_0 : i32, i32
  }
  func.func @transform_6(%arg0: i32) -> (i32, i32) {
    %c0_i32 = arith.constant 0 : i32
    %c0_i32_0 = arith.constant 0 : i32
    %c0_i32_1 = arith.constant 0 : i32
    return %c0_i32, %c0_i32_0 : i32, i32
  }
  func.func @transform_7(%arg0: i32) -> (i32, i32) {
    %c0_i32 = arith.constant 0 : i32
    %c0_i32_0 = arith.constant 0 : i32
    %c0_i32_1 = arith.constant 0 : i32
    return %c0_i32, %c0_i32_0 : i32, i32
  }
  func.func @transform_8(%arg0: i32) -> (i32, i32, i32) {
    %c0_i32 = arith.constant 0 : i32
    %c0_i32_0 = arith.constant 0 : i32
    %c0_i32_1 = arith.constant 0 : i32
    return %arg0, %c0_i32, %c0_i32_0 : i32, i32, i32
  }
}

</mosaic_0001>

<llo_original>
// kernel: tpu_custom_call.1
$region0: #{tpu_custom_call.1}
  #allocation0 [shape = 'u32[]', space=smem, size = 0x4, offset = 0x4, fixed_abs, tag = 'smem constant byte address 0x4 - core index']
  #allocation1 [shape = 'u32[144,128]{1,0:T(1,128)}', space=vmem, size = 0x12000, scoped, tag = 'internal scratch']
  %s0 = inlined_call_operand.vmem [shape: f32[2,16,32], index: 0, kind: input, shape index: {}]
  %s1 = inlined_call_operand.vmem [shape: f32[32,192], index: 1, kind: input, shape index: {}]
  %s2 = inlined_call_operand.vmem [shape: f32[1,192], index: 2, kind: input, shape index: {}]
  %s3 = inlined_call_operand.hbm [shape: f32[64,64], index: 3, kind: input, shape index: {}]
  %s4 = inlined_call_operand.hbm [shape: f32[64,64], index: 4, kind: input, shape index: {}]
  %s5 = inlined_call_operand.hbm [shape: f32[128,128], index: 5, kind: input, shape index: {}]
  %s6 = inlined_call_operand.vmem [shape: f32[64,32], index: 6, kind: input, shape index: {}]
  %s7 = inlined_call_operand.vmem [shape: f32[1,32], index: 7, kind: input, shape index: {}]
  %s8 = inlined_call_operand.hbm [shape: f32[2,16,32], index: 8, kind: output, shape index: {}]
  %s9 = sld [smem:[#allocation0]]
  $region77: #{tpu_custom_call.1} parent=0
    _
  %s11 = ssub.s32 1, %s9
  %s12 = scalar_select 0, %s11, %s9
  $region1: #{tpu_custom_call.1} parent=0
    #allocation2 [shape = 'u8[32768]{0}', space=vmem, size = 0x8000, scoped, tag = 'input window, operand 3, single buffered']
    #allocation3 [shape = 's32[2]{0}', space=sflag, size = 0x8, scoped, tag = 'scoped memory for tpu_custom_call.1']
    #allocation4 [shape = 's32[2]{0}', space=sflag, size = 0x8, scoped, tag = 'scoped memory for tpu_custom_call.1']
    #allocation5 [shape = 'u8[32768]{0}', space=vmem, size = 0x8000, scoped, tag = 'input window, operand 4, single buffered']
    #allocation6 [shape = 's32[1]{0}', space=sflag, size = 0x4, scoped, tag = 'scoped memory for tpu_custom_call.1']
    #allocation7 [shape = 'u8[65536]{0}', space=vmem, size = 0x10000, scoped, tag = 'input window, operand 5, single buffered']
    #allocation8 [shape = 'u8[16384]{0}', space=vmem, size = 0x4000, scoped, tag = 'output window, operand 0']
    %13 = vsyncpa [#allocation3], 0
    %14 = vsyncpa [#allocation6], 0
    %15 = vsyncpa [#allocation4], 0
    %s16 = scalar_lea.sflag [#allocation4], 1
    %17 = vsyncpa %s16, 0
    loop: start=0, step=1, limit=4
    $region2: #{tpu_custom_call.1} parent=1 // loop_pre_header
      _
    $region3: #{tpu_custom_call.1} parent=1 // loop_header
      %s19 = sphi 0, %s23
      %p20 = scmp.ge.s32.totalorder %s19, 4
      %s29 = sphi 0, %s31
      %s32 = sphi 0, %s29
      %s33 = sphi 0, %s32
      %s49 = sphi 0, %s33
      %s53 = sphi 0, %s53
      %s55 = sphi 0, %s53
      %s56 = sphi 0, %s55
      %s70 = sphi 0, %s56
      %s74 = sphi 0, %s74
      %s76 = sphi 0, %s74
      %s77 = sphi 0, %s76
      %s91 = sphi 0, %s77
      %s95 = sphi 0, %s95
      %s97 = sphi 0, %s95
      %s98 = sphi 0, %s97
      %s112 = sphi 0, %s98
      %s116 = sphi 0, %s116
      %s118 = sphi 0, %s116
      %s119 = sphi 0, %s118
      %s133 = sphi 0, %s119
      %s137 = sphi 0, %s137
      %s139 = sphi 0, %s137
      %s140 = sphi 0, %s139
      %s154 = sphi 0, %s140
      %s158 = sphi 0, %s158
      %s160 = sphi 0, %s158
      %s161 = sphi 0, %s160
      %s175 = sphi 0, %s161
      %s179 = sphi 0, %s179
      %s181 = sphi 0, %s179
      %s182 = sphi 0, %s181
      %s196 = sphi 0, %s182
      %s202 = sphi 0, %s204
      %s205 = sphi 0, %s202
      %s206 = sphi 0, %s205
      %s222 = sphi 0, %s206
    $region4: #{tpu_custom_call.1} parent=1 // loop_header_branch
      %22 = sbr.rel (%p20) target = $region8
    $region5: #{tpu_custom_call.1} parent=1 // loop_body
      %s24 = ssub.s32 %s19, 1
      %s25 = ssub.s32 %s19, 2
      %s26 = sadd.s32 %s19, 1
      %s27 = ssub.s32 %s19, %s26
      %p28 = scmp.eq.s32.totalorder %s27, 0
      %s30 = sadd.s32 %s29, 1
      %s31 = scalar_select %p28, %s29, %s30
      %p34 = pneg %p28
      %p35 = scmp.eq.s32.totalorder %s19, 1
      %p36 = por %p34, %p35
      %p37 = scmp.ne.s32.totalorder %s29, %s32
      %p38 = scmp.eq.s32.totalorder %s19, 0
      %p39 = por %p37, %p38
      %p40 = scmp.ne.s32.totalorder %s29, %s32
      %p41 = scmp.eq.s32.totalorder %s24, 1
      %p42 = por %p40, %p41
      %p43 = scmp.ne.s32.totalorder %s32, %s33
      %p44 = scmp.eq.s32.totalorder %s24, 0
      %p45 = por %p43, %p44
      %p46 = scmp.ne.s32.totalorder %s32, %s33
      %p47 = scmp.eq.s32.totalorder %s25, 1
      %p48 = por %p46, %p47
      %p50 = scmp.ne.s32.totalorder %s33, %s49
      %p51 = scmp.eq.s32.totalorder %s25, 0
      %p52 = por %p50, %p51
      %s54 = sadd.s32 %s53, 1
      %p57 = scmp.eq.s32.totalorder %s19, 1
      %p58 = scmp.ne.s32.totalorder %s53, %s55
      %p59 = scmp.eq.s32.totalorder %s19, 0
      %p60 = por %p58, %p59
      %p61 = scmp.ne.s32.totalorder %s53, %s55
      %p62 = scmp.eq.s32.totalorder %s24, 1
      %p63 = por %p61, %p62
      %p64 = scmp.ne.s32.totalorder %s55, %s56
      %p65 = scmp.eq.s32.totalorder %s24, 0
      %p66 = por %p64, %p65
      %p67 = scmp.ne.s32.totalorder %s55, %s56
      %p68 = scmp.eq.s32.totalorder %s25, 1
      %p69 = por %p67, %p68
      %p71 = scmp.ne.s32.totalorder %s56, %s70
      %p72 = scmp.eq.s32.totalorder %s25, 0
      %p73 = por %p71, %p72
      %s75 = sadd.s32 %s74, 1
      %p78 = scmp.eq.s32.totalorder %s19, 1
      %p79 = scmp.ne.s32.totalorder %s74, %s76
      %p80 = scmp.eq.s32.totalorder %s19, 0
      %p81 = por %p79, %p80
      %p82 = scmp.ne.s32.totalorder %s74, %s76
      %p83 = scmp.eq.s32.totalorder %s24, 1
      %p84 = por %p82, %p83
      %p85 = scmp.ne.s32.totalorder %s76, %s77
      %p86 = scmp.eq.s32.totalorder %s24, 0
      %p87 = por %p85, %p86
      %p88 = scmp.ne.s32.totalorder %s76, %s77
      %p89 = scmp.eq.s32.totalorder %s25, 1
      %p90 = por %p88, %p89
      %p92 = scmp.ne.s32.totalorder %s77, %s91
      %p93 = scmp.eq.s32.totalorder %s25, 0
      %p94 = por %p92, %p93
      %s96 = sadd.s32 %s95, 1
      %p99 = scmp.eq.s32.totalorder %s19, 1
      %p100 = scmp.ne.s32.totalorder %s95, %s97
      %p101 = scmp.eq.s32.totalorder %s19, 0
      %p102 = por %p100, %p101
      %p103 = scmp.ne.s32.totalorder %s95, %s97
      %p104 = scmp.eq.s32.totalorder %s24, 1
      %p105 = por %p103, %p104
      %p106 = scmp.ne.s32.totalorder %s97, %s98
      %p107 = scmp.eq.s32.totalorder %s24, 0
      %p108 = por %p106, %p107
      %p109 = scmp.ne.s32.totalorder %s97, %s98
      %p110 = scmp.eq.s32.totalorder %s25, 1
      %p111 = por %p109, %p110
      %p113 = scmp.ne.s32.totalorder %s98, %s112
      %p114 = scmp.eq.s32.totalorder %s25, 0
      %p115 = por %p113, %p114
      %s117 = sadd.s32 %s116, 1
      %p120 = scmp.eq.s32.totalorder %s19, 1
      %p121 = scmp.ne.s32.totalorder %s116, %s118
      %p122 = scmp.eq.s32.totalorder %s19, 0
      %p123 = por %p121, %p122
      %p124 = scmp.ne.s32.totalorder %s116, %s118
      %p125 = scmp.eq.s32.totalorder %s24, 1
      %p126 = por %p124, %p125
      %p127 = scmp.ne.s32.totalorder %s118, %s119
      %p128 = scmp.eq.s32.totalorder %s24, 0
      %p129 = por %p127, %p128
      %p130 = scmp.ne.s32.totalorder %s118, %s119
      %p131 = scmp.eq.s32.totalorder %s25, 1
      %p132 = por %p130, %p131
      %p134 = scmp.ne.s32.totalorder %s119, %s133
      %p135 = scmp.eq.s32.totalorder %s25, 0
      %p136 = por %p134, %p135
      %s138 = sadd.s32 %s137, 1
      %p141 = scmp.eq.s32.totalorder %s19, 1
      %p142 = scmp.ne.s32.totalorder %s137, %s139
      %p143 = scmp.eq.s32.totalorder %s19, 0
      %p144 = por %p142, %p143
      %p145 = scmp.ne.s32.totalorder %s137, %s139
      %p146 = scmp.eq.s32.totalorder %s24, 1
      %p147 = por %p145, %p146
      %p148 = scmp.ne.s32.totalorder %s139, %s140
      %p149 = scmp.eq.s32.totalorder %s24, 0
      %p150 = por %p148, %p149
      %p151 = scmp.ne.s32.totalorder %s139, %s140
      %p152 = scmp.eq.s32.totalorder %s25, 1
      %p153 = por %p151, %p152
      %p155 = scmp.ne.s32.totalorder %s140, %s154
      %p156 = scmp.eq.s32.totalorder %s25, 0
      %p157 = por %p155, %p156
      %s159 = sadd.s32 %s158, 1
      %p162 = scmp.eq.s32.totalorder %s19, 1
      %p163 = scmp.ne.s32.totalorder %s158, %s160
      %p164 = scmp.eq.s32.totalorder %s19, 0
      %p165 = por %p163, %p164
      %p166 = scmp.ne.s32.totalorder %s158, %s160
      %p167 = scmp.eq.s32.totalorder %s24, 1
      %p168 = por %p166, %p167
      %p169 = scmp.ne.s32.totalorder %s160, %s161
      %p170 = scmp.eq.s32.totalorder %s24, 0
      %p171 = por %p169, %p170
      %p172 = scmp.ne.s32.totalorder %s160, %s161
      %p173 = scmp.eq.s32.totalorder %s25, 1
      %p174 = por %p172, %p173
      %p176 = scmp.ne.s32.totalorder %s161, %s175
      %p177 = scmp.eq.s32.totalorder %s25, 0
      %p178 = por %p176, %p177
      %s180 = sadd.s32 %s179, 1
      %p183 = scmp.eq.s32.totalorder %s19, 1
      %p184 = scmp.ne.s32.totalorder %s179, %s181
      %p185 = scmp.eq.s32.totalorder %s19, 0
      %p186 = por %p184, %p185
      %p187 = scmp.ne.s32.totalorder %s179, %s181
      %p188 = scmp.eq.s32.totalorder %s24, 1
      %p189 = por %p187, %p188
      %p190 = scmp.ne.s32.totalorder %s181, %s182
      %p191 = scmp.eq.s32.totalorder %s24, 0
      %p192 = por %p190, %p191
      %p193 = scmp.ne.s32.totalorder %s181, %s182
      %p194 = scmp.eq.s32.totalorder %s25, 1
      %p195 = por %p193, %p194
      %p197 = scmp.ne.s32.totalorder %s182, %s196
      %p198 = scmp.eq.s32.totalorder %s25, 0
      %p199 = por %p197, %p198
      %s200 = ssub.s32 %s19, %s26
      %p201 = scmp.eq.s32.totalorder %s200, 0
      %s203 = sadd.s32 %s202, 1
      %s204 = scalar_select %p201, %s202, %s203
      %p207 = pneg %p201
      %p208 = scmp.eq.s32.totalorder %s19, 1
      %p209 = por %p207, %p208
      %p210 = scmp.ne.s32.totalorder %s202, %s205
      %p211 = scmp.eq.s32.totalorder %s19, 0
      %p212 = por %p210, %p211
      %p213 = scmp.ne.s32.totalorder %s202, %s205
      %p214 = scmp.eq.s32.totalorder %s24, 1
      %p215 = por %p213, %p214
      %p216 = scmp.ne.s32.totalorder %s205, %s206
      %p217 = scmp.eq.s32.totalorder %s24, 0
      %p218 = por %p216, %p217
      %p219 = scmp.ne.s32.totalorder %s205, %s206
      %p220 = scmp.eq.s32.totalorder %s25, 1
      %p221 = por %p219, %p220
      %p223 = scmp.ne.s32.totalorder %s206, %s222
      %p224 = scmp.eq.s32.totalorder %s25, 0
      %p225 = por %p223, %p224
      %p226 = scmp.le.s32.totalorder 1, %s19
      %p227 = scmp.lt.s32.totalorder %s19, 3
      %p228 = pnand %p226, %p227
      %p229 = pneg %p228
      // Predicated region
      $region9: #{tpu_custom_call.1} parent=5 // pred_check
        _
      $region10: #{tpu_custom_call.1} parent=5 // pred_check_branch
        %231 = sbr.rel (%p228) target = $region12
      $region11: #{tpu_custom_call.1} parent=5 // pred_region
        %s232 = ssub.s32 %s19, 1
        // Predicated region
        $region13: #{tpu_custom_call.1} parent=11 // pred_check
          %p233 = pneg %p66
        $region14: #{tpu_custom_call.1} parent=11 // pred_check_branch
          %235 = sbr.rel (%p233) target = $region16
        $region15: #{tpu_custom_call.1} parent=11 // pred_region
          _
        $region16: #{tpu_custom_call.1} parent=11 // pred_fallthru
          _
        // Predicated region
        $region17: #{tpu_custom_call.1} parent=11 // pred_check
          %p236 = pneg %p87
        $region18: #{tpu_custom_call.1} parent=11 // pred_check_branch
          %238 = sbr.rel (%p236) target = $region20
        $region19: #{tpu_custom_call.1} parent=11 // pred_region
          _
        $region20: #{tpu_custom_call.1} parent=11 // pred_fallthru
          _
        // Predicated region
        $region21: #{tpu_custom_call.1} parent=11 // pred_check
          %p239 = pneg %p108
        $region22: #{tpu_custom_call.1} parent=11 // pred_check_branch
          %241 = sbr.rel (%p239) target = $region24
        $region23: #{tpu_custom_call.1} parent=11 // pred_region
          %s243 = ssub.s32 1024, 1024
          %244 = vsyncadd [#allocation3], %s243
          %s245 = sshll.u32 [#allocation2], 4
          %s246 = int_to_ptr.vmem [resolvable:$true] %s245
          %251 = dma.hbm_to_vmem [thread:$0]  %s3, 1024, %s246, [#allocation3], 128, 128, 8
        $region24: #{tpu_custom_call.1} parent=11 // pred_fallthru
          _
        // Predicated region
        $region25: #{tpu_custom_call.1} parent=11 // pred_check
          %p252 = pneg %p129
        $region26: #{tpu_custom_call.1} parent=11 // pred_check_branch
          %254 = sbr.rel (%p252) target = $region28
        $region27: #{tpu_custom_call.1} parent=11 // pred_region
          %s256 = ssub.s32 1024, 1024
          %257 = vsyncadd [#allocation6], %s256
          %s258 = sshll.u32 [#allocation5], 4
          %s259 = int_to_ptr.vmem [resolvable:$true] %s258
          %264 = dma.hbm_to_vmem [thread:$0]  %s4, 1024, %s259, [#allocation6], 128, 128, 8
        $region28: #{tpu_custom_call.1} parent=11 // pred_fallthru
          _
        // Predicated region
        $region29: #{tpu_custom_call.1} parent=11 // pred_check
          %p265 = pneg %p150
        $region30: #{tpu_custom_call.1} parent=11 // pred_check_branch
          %267 = sbr.rel (%p265) target = $region32
        $region31: #{tpu_custom_call.1} parent=11 // pred_region
          %s269 = ssub.s32 2048, 2048
          %270 = vsyncadd [#allocation6], %s269
          %s271 = sshll.u32 [#allocation7], 4
          %s272 = int_to_ptr.vmem [resolvable:$true] %s271
          %277 = dma.hbm_to_vmem [thread:$0]  %s5, 2048, %s272, [#allocation6], 128, 128, 8
        $region32: #{tpu_custom_call.1} parent=11 // pred_fallthru
          _
        // Predicated region
        $region33: #{tpu_custom_call.1} parent=11 // pred_check
          %p278 = pneg %p171
        $region34: #{tpu_custom_call.1} parent=11 // pred_check_branch
          %280 = sbr.rel (%p278) target = $region36
        $region35: #{tpu_custom_call.1} parent=11 // pred_region
          _
        $region36: #{tpu_custom_call.1} parent=11 // pred_fallthru
          _
        // Predicated region
        $region37: #{tpu_custom_call.1} parent=11 // pred_check
          %p281 = pneg %p192
        $region38: #{tpu_custom_call.1} parent=11 // pred_check_branch
          %283 = sbr.rel (%p281) target = $region40
        $region39: #{tpu_custom_call.1} parent=11 // pred_region
          _
        $region40: #{tpu_custom_call.1} parent=11 // pred_fallthru
          _
      $region12: #{tpu_custom_call.1} parent=5 // pred_fallthru
        _
      %p284 = scmp.lt.s32.totalorder %s19, 2
      // Predicated region
      $region41: #{tpu_custom_call.1} parent=5 // pred_check
        %p285 = pneg %p284
      $region42: #{tpu_custom_call.1} parent=5 // pred_check_branch
        %287 = sbr.rel (%p285) target = $region44
      $region43: #{tpu_custom_call.1} parent=5 // pred_region
        // Predicated region
        $region45: #{tpu_custom_call.1} parent=43 // pred_check
          %p288 = pneg %p39
        $region46: #{tpu_custom_call.1} parent=43 // pred_check_branch
          %290 = sbr.rel (%p288) target = $region48
        $region47: #{tpu_custom_call.1} parent=43 // pred_region
          %p291 = scmp.lt.s32.totalorder %s19, 1
          %s292 = scalar_select %p291, %s19, 1
          %s293 = smul.addr %s292, 2
          %s294 = smul.addr %s293, 8
          %s295 = scalar_lea.vmem %s0, %s294
        $region48: #{tpu_custom_call.1} parent=43 // pred_fallthru
          _
      $region44: #{tpu_custom_call.1} parent=5 // pred_fallthru
        _
      %p296 = scmp.le.s32.totalorder 1, %s19
      %p297 = scmp.lt.s32.totalorder %s19, 3
      %p298 = pnand %p296, %p297
      %p299 = pneg %p298
      // Predicated region
      $region49: #{tpu_custom_call.1} parent=5 // pred_check
        _
      $region50: #{tpu_custom_call.1} parent=5 // pred_check_branch
        %301 = sbr.rel (%p298) target = $region52
      $region51: #{tpu_custom_call.1} parent=5 // pred_region
        %s302 = ssub.s32 %s19, 1
        // Predicated region
        $region53: #{tpu_custom_call.1} parent=51 // pred_check
          %p303 = pneg %p108
        $region54: #{tpu_custom_call.1} parent=51 // pred_check_branch
          %305 = sbr.rel (%p303) target = $region56
        $region55: #{tpu_custom_call.1} parent=51 // pred_region
          %306 = dma.done [#allocation3], 1024
        $region56: #{tpu_custom_call.1} parent=51 // pred_fallthru
          _
        // Predicated region
        $region57: #{tpu_custom_call.1} parent=51 // pred_check
          %p307 = pneg %p129
        $region58: #{tpu_custom_call.1} parent=51 // pred_check_branch
          %309 = sbr.rel (%p307) target = $region60
        $region59: #{tpu_custom_call.1} parent=51 // pred_region
          %310 = dma.done [#allocation6], 1024
        $region60: #{tpu_custom_call.1} parent=51 // pred_fallthru
          _
        // Predicated region
        $region61: #{tpu_custom_call.1} parent=51 // pred_check
          %p311 = pneg %p150
        $region62: #{tpu_custom_call.1} parent=51 // pred_check_branch
          %313 = sbr.rel (%p311) target = $region64
        $region63: #{tpu_custom_call.1} parent=51 // pred_region
          %314 = dma.done [#allocation6], 2048
        $region64: #{tpu_custom_call.1} parent=51 // pred_fallthru
          _
        %p315 = scmp.lt.s32.totalorder %s24, 1
        %s316 = scalar_select %p315, %s24, 1
        %s317 = smul.addr %s316, 2
        %s318 = smul.addr %s317, 8
        %s319 = scalar_lea.vmem %s0, %s318
        %p320 = pneg %p45
        %p321 = pneg %p42
        %p322 = pneg %p66
        %p323 = pneg %p63
        %p324 = pneg %p87
        %p325 = pneg %p84
        %p326 = pneg %p108
        %p327 = pneg %p105
        %p328 = pneg %p129
        %p329 = pneg %p126
        %p330 = pneg %p150
        %p331 = pneg %p147
        %p332 = pneg %p171
        %p333 = pneg %p168
        %p334 = pneg %p192
        %p335 = pneg %p189
        %p336 = pneg %p218
        %p337 = pneg %p215
        %s338 = sand.u32 %s205, 1
        %s339 = scalar_lea.sflag [#allocation4], %s338
        %s340 = sand.u32 %s205, 1
        %s341 = smul.addr %s340, 16
        %s342 = scalar_lea.vmem [#allocation8], %s341
        %p343 = scmp.lt.s32.totalorder %s24, 1
        %s344 = scalar_select %p343, %s24, 1
        %s345 = smul.addr %s344, 2
        %s346 = smul.addr %s345, 8
        %s347 = scalar_lea.vmem %s0, %s346
        %v348 = vld [vmem:[%s347] sm:$0xff]
        %v349 = vld [vmem:[%s347 + $0x8] sm:$0xff]
        %v350 = vld [vmem:[%s1] sm:$0xff]
        %v351 = vld [vmem:[%s1 + $0x8] sm:$0xff]
        %v352 = vld [vmem:[%s1 + $0x10] sm:$0xff]
        %v353 = vld [vmem:[%s1 + $0x18] sm:$0xff]
        %v354 = vld [vmem:[%s1 + $0x20] sm:$0xff]
        %v355 = vld [vmem:[%s1 + $0x28] sm:$0xff]
        %v356 = vld [vmem:[%s1 + $0x30] sm:$0xff]
        %v357 = vld [vmem:[%s1 + $0x38] sm:$0xff]
        %v358 = vld [vmem:[%s2] sm:$0x3]
        %v360 = vlaneseq
        %v361 = vshrl.u32 %v360, 7
        %v362 = vsub.s32 0, %v361
        %v363 = vrot.slane %v358, %v362
        %v364 = vlaneseq
        %v365 = vshrl.u32 %v364, 7
        %v366 = vsub.s32 1, %v365
        %v367 = vrot.slane %v358, %v366
        %vm370 = vcmask 261120
        %v372 = vsel %vm370, %v348, 0
        %v375 = vsel %vm370, %v349, 0
        %377 = vmatprep.subr.mxu0 0.0
        %378 = vmatpush1.msra.mxu0 0.0
        %379 = vmatprep.subr.mxu0 0.0
        %380 = vmatpush1.msra.mxu0 0.0
        %381 = vmatprep.subr.mxu0 0.0
        %382 = vmatpush1.msra.mxu0 0.0
        %383 = vmatprep.subr.mxu0 0.0
        %384 = vmatpush1.msra.mxu0 0.0
        %385 = vmatprep.subr.mxu0 0.0
        %386 = vmatpush1.msra.mxu0 0.0
        %387 = vmatprep.subr.mxu0 0.0
        %388 = vmatpush1.msra.mxu0 0.0
        %389 = vmatprep.subr.mxu0 0.0
        %390 = vmatpush1.msra.mxu0 0.0
        %391 = vmatprep.subr.mxu0 0.0
        %392 = vmatpush1.msra.mxu0 0.0
        %393 = vmatprep.subr.mxu0 0.0
        %394 = vmatpush1.msra.mxu0 0.0
        %395 = vmatprep.subr.mxu0 0.0
        %396 = vmatpush1.msra.mxu0 0.0
        %397 = vmatprep.subr.mxu0 0.0
        %398 = vmatpush1.msra.mxu0 0.0
        %399 = vmatprep.subr.mxu0 0.0
        %400 = vmatpush1.msra.mxu0 0.0
        %401 = vmatprep.subr.mxu0 %v357
        %402 = vmatpush1.msra.mxu0 %v356
        %403 = vmatprep.subr.mxu0 %v355
        %404 = vmatpush1.msra.mxu0 %v354
        %405 = vmatprep.subr.mxu0 %v353
        %406 = vmatpush1.msra.mxu0 %v352
        %407 = vmatprep.subr.mxu0 %v351
        %408 = vmatpush1.msra.mxu0 %v350
        %409 = vmatprep.subr.mxu0 0.0
        %410 = vmatpush2.msra.mxu0 0.0
        %411 = vmatprep.subr.mxu0 0.0
        %412 = vmatpush2.msra.mxu0 0.0
        %413 = vmatprep.subr.mxu0 0.0
        %414 = vmatpush2.msra.mxu0 0.0
        %415 = vmatprep.subr.mxu0 0.0
        %416 = vmatpush2.msra.mxu0 0.0
        %417 = vmatprep.subr.mxu0 0.0
        %418 = vmatpush2.msra.mxu0 0.0
        %419 = vmatprep.subr.mxu0 0.0
        %420 = vmatpush2.msra.mxu0 0.0
        %421 = vmatprep.subr.mxu0 0.0
        %422 = vmatpush2.msra.mxu0 0.0
        %423 = vmatprep.subr.mxu0 0.0
        %424 = vmatpush2.msra.mxu0 0.0
        %425 = vmatprep.subr.mxu0 0.0
        %426 = vmatpush2.msra.mxu0 0.0
        %427 = vmatprep.subr.mxu0 0.0
        %428 = vmatpush2.msra.mxu0 0.0
        %429 = vmatprep.subr.mxu0 0.0
        %430 = vmatpush2.msra.mxu0 0.0
        %431 = vmatprep.subr.mxu0 0.0
        %432 = vmatpush2.msra.mxu0 0.0
        %433 = vmatprep.subr.mxu0 0.0
        %434 = vmatpush2.msra.mxu0 0.0
        %435 = vmatprep.subr.mxu0 0.0
        %436 = vmatpush2.msra.mxu0 0.0
        %437 = vmatprep.subr.mxu0 0.0
        %438 = vmatpush2.msra.mxu0 0.0
        %439 = vmatprep.subr.mxu0 0.0
        %440 = vmatpush2.msra.mxu0 0.0
        %441 = vmatprep.mubr.f32.mxu0 0.0
        %442 = vmatmul.mubr.f32.gmra.mxu0 %v372
        %v443 = vpop.f32.mrf.mxu0
        %v444 = vadd.f32 %v363, %v443
        %v445 = vpop.f32.mrf.mxu0
        %v446 = vadd.f32 %v367, %v445
        %447 = vmatprep.mubr.f32.mxu0 0.0
        %448 = vmatmul.mubr.f32.gmra.mxu0 %v375
        %v449 = vpop.f32.mrf.mxu0
        %v450 = vadd.f32 %v363, %v449
        %v451 = vpop.f32.mrf.mxu0
        %v452 = vadd.f32 %v367, %v451
        %453 = vdwg.mxu0
        %v454 = vld [vmem:[#allocation2] sm:$0xff]
        %v455 = vld [vmem:[#allocation2 + $0x8] sm:$0xff]
        %v456 = vld [vmem:[#allocation2 + $0x10] sm:$0xff]
        %v457 = vld [vmem:[#allocation2 + $0x18] sm:$0xff]
        %v458 = vld [vmem:[#allocation2 + $0x20] sm:$0xff]
        %v459 = vld [vmem:[#allocation2 + $0x28] sm:$0xff]
        %v460 = vld [vmem:[#allocation2 + $0x30] sm:$0xff]
        %v461 = vld [vmem:[#allocation2 + $0x38] sm:$0xff]
        %vm462 = vcmask 523264
        %v464 = vsel %vm462, %v444, 0
        %v467 = vsel %vm462, %v450, 0
        %469 = vmatprep.subr.mxu0 0.0
        %470 = vmatpush1.msra.mxu0 0.0
        %471 = vmatprep.subr.mxu0 0.0
        %472 = vmatpush1.msra.mxu0 0.0
        %473 = vmatprep.subr.mxu0 0.0
        %474 = vmatpush1.msra.mxu0 0.0
        %475 = vmatprep.subr.mxu0 0.0
        %476 = vmatpush1.msra.mxu0 0.0
        %477 = vmatprep.subr.mxu0 0.0
        %478 = vmatpush1.msra.mxu0 0.0
        %479 = vmatprep.subr.mxu0 0.0
        %480 = vmatpush1.msra.mxu0 0.0
        %481 = vmatprep.subr.mxu0 0.0
        %482 = vmatpush1.msra.mxu0 0.0
        %483 = vmatprep.subr.mxu0 0.0
        %484 = vmatpush1.msra.mxu0 0.0
        %485 = vmatprep.subr.mxu0 0.0
        %486 = vmatpush1.msra.mxu0 %v461
        %487 = vmatprep.subr.mxu0 0.0
        %488 = vmatpush1.msra.mxu0 %v460
        %489 = vmatprep.subr.mxu0 0.0
        %490 = vmatpush1.msra.mxu0 %v459
        %491 = vmatprep.subr.mxu0 0.0
        %492 = vmatpush1.msra.mxu0 %v458
        %493 = vmatprep.subr.mxu0 0.0
        %494 = vmatpush1.msra.mxu0 %v457
        %495 = vmatprep.subr.mxu0 0.0
        %496 = vmatpush1.msra.mxu0 %v456
        %497 = vmatprep.subr.mxu0 0.0
        %498 = vmatpush1.msra.mxu0 %v455
        %499 = vmatprep.subr.mxu0 0.0
        %500 = vmatpush1.msra.mxu0 %v454
        %501 = vmatprep.subr.mxu0 0.0
        %502 = vmatpush2.msra.mxu0 0.0
        %503 = vmatprep.subr.mxu0 0.0
        %504 = vmatpush2.msra.mxu0 0.0
        %505 = vmatprep.subr.mxu0 0.0
        %506 = vmatpush2.msra.mxu0 0.0
        %507 = vmatprep.subr.mxu0 0.0
        %508 = vmatpush2.msra.mxu0 0.0
        %509 = vmatprep.subr.mxu0 0.0
        %510 = vmatpush2.msra.mxu0 0.0
        %511 = vmatprep.subr.mxu0 0.0
        %512 = vmatpush2.msra.mxu0 0.0
        %513 = vmatprep.subr.mxu0 0.0
        %514 = vmatpush2.msra.mxu0 0.0
        %515 = vmatprep.subr.mxu0 0.0
        %516 = vmatpush2.msra.mxu0 0.0
        %517 = vmatprep.subr.mxu0 0.0
        %518 = vmatpush2.msra.mxu0 0.0
        %519 = vmatprep.subr.mxu0 0.0
        %520 = vmatpush2.msra.mxu0 0.0
        %521 = vmatprep.subr.mxu0 0.0
        %522 = vmatpush2.msra.mxu0 0.0
        %523 = vmatprep.subr.mxu0 0.0
        %524 = vmatpush2.msra.mxu0 0.0
        %525 = vmatprep.subr.mxu0 0.0
        %526 = vmatpush2.msra.mxu0 0.0
        %527 = vmatprep.subr.mxu0 0.0
        %528 = vmatpush2.msra.mxu0 0.0
        %529 = vmatprep.subr.mxu0 0.0
        %530 = vmatpush2.msra.mxu0 0.0
        %531 = vmatprep.subr.mxu0 0.0
        %532 = vmatpush2.msra.mxu0 0.0
        %533 = vmatprep.mubr.f32.mxu0 0.0
        %534 = vmatmul.mubr.f32.gmra.mxu0 %v464
        %v535 = vpop.f32.mrf.mxu0
        %v536 = vadd.f32 0.0, %v535
        %v537 = vpop.f32.mrf.mxu0
        %538 = vmatprep.mubr.f32.mxu0 0.0
        %539 = vmatmul.mubr.f32.gmra.mxu0 %v467
        %v540 = vpop.f32.mrf.mxu0
        %v541 = vadd.f32 0.0, %v540
        %v542 = vpop.f32.mrf.mxu0
        %543 = vdwg.mxu0
        %544 = vrot.lane.b32.xlu0 %v444, 64
        %v545 = vpop.permute.xlu0 %544
        %546 = vrot.lane.b32.xlu0 %v450, 64
        %v547 = vpop.permute.xlu0 %546
        %vm548 = vcmask 130048
        %v549 = vsel %vm548, %v444, 0
        %v551 = vsel %vm548, %v450, 0
        %v553 = vsel %vm548, %v545, 0
        %v555 = vsel %vm548, %v547, 0
        %557 = vmatprep.subr.mxu0 0.0
        %558 = vmatpush1.xpose.msra.mxu0 0.0
        %559 = vmatprep.subr.mxu0 0.0
        %560 = vmatpush1.xpose.msra.mxu0 0.0
        %561 = vmatprep.subr.mxu0 0.0
        %562 = vmatpush1.xpose.msra.mxu0 0.0
        %563 = vmatprep.subr.mxu0 0.0
        %564 = vmatpush1.xpose.msra.mxu0 0.0
        %565 = vmatprep.subr.mxu0 0.0
        %566 = vmatpush1.xpose.msra.mxu0 0.0
        %567 = vmatprep.subr.mxu0 0.0
        %568 = vmatpush1.xpose.msra.mxu0 0.0
        %569 = vmatprep.subr.mxu0 0.0
        %570 = vmatpush1.xpose.msra.mxu0 0.0
        %571 = vmatprep.subr.mxu0 0.0
        %572 = vmatpush1.xpose.msra.mxu0 0.0
        %573 = vmatprep.subr.mxu0 0.0
        %574 = vmatpush1.xpose.msra.mxu0 0.0
        %575 = vmatprep.subr.mxu0 0.0
        %576 = vmatpush1.xpose.msra.mxu0 0.0
        %577 = vmatprep.subr.mxu0 0.0
        %578 = vmatpush1.xpose.msra.mxu0 0.0
        %579 = vmatprep.subr.mxu0 0.0
        %580 = vmatpush1.xpose.msra.mxu0 0.0
        %581 = vmatprep.subr.mxu0 0.0
        %582 = vmatpush1.xpose.msra.mxu0 0.0
        %583 = vmatprep.subr.mxu0 0.0
        %584 = vmatpush1.xpose.msra.mxu0 0.0
        %585 = vmatprep.subr.mxu0 0.0
        %586 = vmatpush1.xpose.msra.mxu0 %v555
        %587 = vmatprep.subr.mxu0 0.0
        %588 = vmatpush1.xpose.msra.mxu0 %v553
        %589 = vmatprep.subr.mxu0 0.0
        %590 = vmatpush2.xpose.msra.mxu0 0.0
        %591 = vmatprep.subr.mxu0 0.0
        %592 = vmatpush2.xpose.msra.mxu0 0.0
        %593 = vmatprep.subr.mxu0 0.0
        %594 = vmatpush2.xpose.msra.mxu0 0.0
        %595 = vmatprep.subr.mxu0 0.0
        %596 = vmatpush2.xpose.msra.mxu0 0.0
        %597 = vmatprep.subr.mxu0 0.0
        %598 = vmatpush2.xpose.msra.mxu0 0.0
        %599 = vmatprep.subr.mxu0 0.0
        %600 = vmatpush2.xpose.msra.mxu0 0.0
        %601 = vmatprep.subr.mxu0 0.0
        %602 = vmatpush2.xpose.msra.mxu0 0.0
        %603 = vmatprep.subr.mxu0 0.0
        %604 = vmatpush2.xpose.msra.mxu0 0.0
        %605 = vmatprep.subr.mxu0 0.0
        %606 = vmatpush2.xpose.msra.mxu0 0.0
        %607 = vmatprep.subr.mxu0 0.0
        %608 = vmatpush2.xpose.msra.mxu0 0.0
        %609 = vmatprep.subr.mxu0 0.0
        %610 = vmatpush2.xpose.msra.mxu0 0.0
        %611 = vmatprep.subr.mxu0 0.0
        %612 = vmatpush2.xpose.msra.mxu0 0.0
        %613 = vmatprep.subr.mxu0 0.0
        %614 = vmatpush2.xpose.msra.mxu0 0.0
        %615 = vmatprep.subr.mxu0 0.0
        %616 = vmatpush2.xpose.msra.mxu0 0.0
        %617 = vmatprep.subr.mxu0 0.0
        %618 = vmatpush2.xpose.msra.mxu0 0.0
        %619 = vmatprep.subr.mxu0 0.0
        %620 = vmatpush2.xpose.msra.mxu0 0.0
        %621 = vmatprep.mubr.f32.mxu0 0.0
        %622 = vmatmul.mubr.f32.gmra.mxu0 %v549
        %v623 = vpop.f32.mrf.mxu0
        %v624 = vadd.f32 0.0, %v623
        %v625 = vpop.f32.mrf.mxu0
        %626 = vmatprep.mubr.f32.mxu0 0.0
        %627 = vmatmul.mubr.f32.gmra.mxu0 %v551
        %v628 = vpop.f32.mrf.mxu0
        %v629 = vadd.f32 0.0, %v628
        %v630 = vpop.f32.mrf.mxu0
        %631 = vdwg.mxu0
        %632 = vrot.lane.b32.xlu0 %v444, 112
        %v633 = vpop.permute.xlu0 %632
        %634 = vrot.lane.b32.xlu0 %v450, 112
        %v635 = vpop.permute.xlu0 %634
        %636 = vrot.lane.b32.xlu0 %v444, 48
        %v637 = vpop.permute.xlu0 %636
        %638 = vrot.lane.b32.xlu0 %v450, 48
        %v639 = vpop.permute.xlu0 %638
        %v640 = vsel %vm548, %v633, 0
        %v642 = vsel %vm548, %v635, 0
        %v644 = vsel %vm548, %v637, 0
        %v646 = vsel %vm548, %v639, 0
        %648 = vmatprep.subr.mxu0 0.0
        %649 = vmatpush1.xpose.msra.mxu0 0.0
        %650 = vmatprep.subr.mxu0 0.0
        %651 = vmatpush1.xpose.msra.mxu0 0.0
        %652 = vmatprep.subr.mxu0 0.0
        %653 = vmatpush1.xpose.msra.mxu0 0.0
        %654 = vmatprep.subr.mxu0 0.0
        %655 = vmatpush1.xpose.msra.mxu0 0.0
        %656 = vmatprep.subr.mxu0 0.0
        %657 = vmatpush1.xpose.msra.mxu0 0.0
        %658 = vmatprep.subr.mxu0 0.0
        %659 = vmatpush1.xpose.msra.mxu0 0.0
        %660 = vmatprep.subr.mxu0 0.0
        %661 = vmatpush1.xpose.msra.mxu0 0.0
        %662 = vmatprep.subr.mxu0 0.0
        %663 = vmatpush1.xpose.msra.mxu0 0.0
        %664 = vmatprep.subr.mxu0 0.0
        %665 = vmatpush1.xpose.msra.mxu0 0.0
        %666 = vmatprep.subr.mxu0 0.0
        %667 = vmatpush1.xpose.msra.mxu0 0.0
        %668 = vmatprep.subr.mxu0 0.0
        %669 = vmatpush1.xpose.msra.mxu0 0.0
        %670 = vmatprep.subr.mxu0 0.0
        %671 = vmatpush1.xpose.msra.mxu0 0.0
        %672 = vmatprep.subr.mxu0 0.0
        %673 = vmatpush1.xpose.msra.mxu0 0.0
        %674 = vmatprep.subr.mxu0 0.0
        %675 = vmatpush1.xpose.msra.mxu0 0.0
        %676 = vmatprep.subr.mxu0 0.0
        %677 = vmatpush1.xpose.msra.mxu0 %v646
        %678 = vmatprep.subr.mxu0 0.0
        %679 = vmatpush1.xpose.msra.mxu0 %v644
        %680 = vmatprep.subr.mxu0 0.0
        %681 = vmatpush2.xpose.msra.mxu0 0.0
        %682 = vmatprep.subr.mxu0 0.0
        %683 = vmatpush2.xpose.msra.mxu0 0.0
        %684 = vmatprep.subr.mxu0 0.0
        %685 = vmatpush2.xpose.msra.mxu0 0.0
        %686 = vmatprep.subr.mxu0 0.0
        %687 = vmatpush2.xpose.msra.mxu0 0.0
        %688 = vmatprep.subr.mxu0 0.0
        %689 = vmatpush2.xpose.msra.mxu0 0.0
        %690 = vmatprep.subr.mxu0 0.0
        %691 = vmatpush2.xpose.msra.mxu0 0.0
        %692 = vmatprep.subr.mxu0 0.0
        %693 = vmatpush2.xpose.msra.mxu0 0.0
        %694 = vmatprep.subr.mxu0 0.0
        %695 = vmatpush2.xpose.msra.mxu0 0.0
        %696 = vmatprep.subr.mxu0 0.0
        %697 = vmatpush2.xpose.msra.mxu0 0.0
        %698 = vmatprep.subr.mxu0 0.0
        %699 = vmatpush2.xpose.msra.mxu0 0.0
        %700 = vmatprep.subr.mxu0 0.0
        %701 = vmatpush2.xpose.msra.mxu0 0.0
        %702 = vmatprep.subr.mxu0 0.0
        %703 = vmatpush2.xpose.msra.mxu0 0.0
        %704 = vmatprep.subr.mxu0 0.0
        %705 = vmatpush2.xpose.msra.mxu0 0.0
        %706 = vmatprep.subr.mxu0 0.0
        %707 = vmatpush2.xpose.msra.mxu0 0.0
        %708 = vmatprep.subr.mxu0 0.0
        %709 = vmatpush2.xpose.msra.mxu0 0.0
        %710 = vmatprep.subr.mxu0 0.0
        %711 = vmatpush2.xpose.msra.mxu0 0.0
        %712 = vmatprep.mubr.f32.mxu0 0.0
        %713 = vmatmul.mubr.f32.gmra.mxu0 %v640
        %v714 = vpop.f32.mrf.mxu0
        %v715 = vadd.f32 0.0, %v714
        %v716 = vpop.f32.mrf.mxu0
        %717 = vmatprep.mubr.f32.mxu0 0.0
        %718 = vmatmul.mubr.f32.gmra.mxu0 %v642
        %v719 = vpop.f32.mrf.mxu0
        %v720 = vadd.f32 0.0, %v719
        %v721 = vpop.f32.mrf.mxu0
        %722 = vdwg.mxu0
        %723 = vrot.lane.b32.xlu0 %v444, 96
        %v724 = vpop.permute.xlu0 %723
        %725 = vrot.lane.b32.xlu0 %v450, 96
        %v726 = vpop.permute.xlu0 %725
        %727 = vrot.lane.b32.xlu0 %v444, 32
        %v728 = vpop.permute.xlu0 %727
        %729 = vrot.lane.b32.xlu0 %v450, 32
        %v730 = vpop.permute.xlu0 %729
        %v731 = vsel %vm548, %v724, 0
        %v733 = vsel %vm548, %v726, 0
        %v735 = vsel %vm548, %v728, 0
        %v737 = vsel %vm548, %v730, 0
        %739 = vmatprep.subr.mxu0 0.0
        %740 = vmatpush1.xpose.msra.mxu0 0.0
        %741 = vmatprep.subr.mxu0 0.0
        %742 = vmatpush1.xpose.msra.mxu0 0.0
        %743 = vmatprep.subr.mxu0 0.0
        %744 = vmatpush1.xpose.msra.mxu0 0.0
        %745 = vmatprep.subr.mxu0 0.0
        %746 = vmatpush1.xpose.msra.mxu0 0.0
        %747 = vmatprep.subr.mxu0 0.0
        %748 = vmatpush1.xpose.msra.mxu0 0.0
        %749 = vmatprep.subr.mxu0 0.0
        %750 = vmatpush1.xpose.msra.mxu0 0.0
        %751 = vmatprep.subr.mxu0 0.0
        %752 = vmatpush1.xpose.msra.mxu0 0.0
        %753 = vmatprep.subr.mxu0 0.0
        %754 = vmatpush1.xpose.msra.mxu0 0.0
        %755 = vmatprep.subr.mxu0 0.0
        %756 = vmatpush1.xpose.msra.mxu0 0.0
        %757 = vmatprep.subr.mxu0 0.0
        %758 = vmatpush1.xpose.msra.mxu0 0.0
        %759 = vmatprep.subr.mxu0 0.0
        %760 = vmatpush1.xpose.msra.mxu0 0.0
        %761 = vmatprep.subr.mxu0 0.0
        %762 = vmatpush1.xpose.msra.mxu0 0.0
        %763 = vmatprep.subr.mxu0 0.0
        %764 = vmatpush1.xpose.msra.mxu0 0.0
        %765 = vmatprep.subr.mxu0 0.0
        %766 = vmatpush1.xpose.msra.mxu0 0.0
        %767 = vmatprep.subr.mxu0 0.0
        %768 = vmatpush1.xpose.msra.mxu0 %v737
        %769 = vmatprep.subr.mxu0 0.0
        %770 = vmatpush1.xpose.msra.mxu0 %v735
        %771 = vmatprep.subr.mxu0 0.0
        %772 = vmatpush2.xpose.msra.mxu0 0.0
        %773 = vmatprep.subr.mxu0 0.0
        %774 = vmatpush2.xpose.msra.mxu0 0.0
        %775 = vmatprep.subr.mxu0 0.0
        %776 = vmatpush2.xpose.msra.mxu0 0.0
        %777 = vmatprep.subr.mxu0 0.0
        %778 = vmatpush2.xpose.msra.mxu0 0.0
        %779 = vmatprep.subr.mxu0 0.0
        %780 = vmatpush2.xpose.msra.mxu0 0.0
        %781 = vmatprep.subr.mxu0 0.0
        %782 = vmatpush2.xpose.msra.mxu0 0.0
        %783 = vmatprep.subr.mxu0 0.0
        %784 = vmatpush2.xpose.msra.mxu0 0.0
        %785 = vmatprep.subr.mxu0 0.0
        %786 = vmatpush2.xpose.msra.mxu0 0.0
        %787 = vmatprep.subr.mxu0 0.0
        %788 = vmatpush2.xpose.msra.mxu0 0.0
        %789 = vmatprep.subr.mxu0 0.0
        %790 = vmatpush2.xpose.msra.mxu0 0.0
        %791 = vmatprep.subr.mxu0 0.0
        %792 = vmatpush2.xpose.msra.mxu0 0.0
        %793 = vmatprep.subr.mxu0 0.0
        %794 = vmatpush2.xpose.msra.mxu0 0.0
        %795 = vmatprep.subr.mxu0 0.0
        %796 = vmatpush2.xpose.msra.mxu0 0.0
        %797 = vmatprep.subr.mxu0 0.0
        %798 = vmatpush2.xpose.msra.mxu0 0.0
        %799 = vmatprep.subr.mxu0 0.0
        %800 = vmatpush2.xpose.msra.mxu0 0.0
        %801 = vmatprep.subr.mxu0 0.0
        %802 = vmatpush2.xpose.msra.mxu0 0.0
        %803 = vmatprep.mubr.f32.mxu0 0.0
        %804 = vmatmul.mubr.f32.gmra.mxu0 %v731
        %v805 = vpop.f32.mrf.mxu0
        %v806 = vadd.f32 0.0, %v805
        %v807 = vpop.f32.mrf.mxu0
        %808 = vmatprep.mubr.f32.mxu0 0.0
        %809 = vmatmul.mubr.f32.gmra.mxu0 %v733
        %v810 = vpop.f32.mrf.mxu0
        %v811 = vadd.f32 0.0, %v810
        %v812 = vpop.f32.mrf.mxu0
        %813 = vdwg.mxu0
        %814 = vrot.lane.b32.xlu0 %v444, 80
        %v815 = vpop.permute.xlu0 %814
        %816 = vrot.lane.b32.xlu0 %v450, 80
        %v817 = vpop.permute.xlu0 %816
        %818 = vrot.lane.b32.xlu0 %v444, 16
        %v819 = vpop.permute.xlu0 %818
        %820 = vrot.lane.b32.xlu0 %v450, 16
        %v821 = vpop.permute.xlu0 %820
        %v822 = vsel %vm548, %v815, 0
        %v824 = vsel %vm548, %v817, 0
        %v826 = vsel %vm548, %v819, 0
        %v828 = vsel %vm548, %v821, 0
        %830 = vmatprep.subr.mxu0 0.0
        %831 = vmatpush1.xpose.msra.mxu0 0.0
        %832 = vmatprep.subr.mxu0 0.0
        %833 = vmatpush1.xpose.msra.mxu0 0.0
        %834 = vmatprep.subr.mxu0 0.0
        %835 = vmatpush1.xpose.msra.mxu0 0.0
        %836 = vmatprep.subr.mxu0 0.0
        %837 = vmatpush1.xpose.msra.mxu0 0.0
        %838 = vmatprep.subr.mxu0 0.0
        %839 = vmatpush1.xpose.msra.mxu0 0.0
        %840 = vmatprep.subr.mxu0 0.0
        %841 = vmatpush1.xpose.msra.mxu0 0.0
        %842 = vmatprep.subr.mxu0 0.0
        %843 = vmatpush1.xpose.msra.mxu0 0.0
        %844 = vmatprep.subr.mxu0 0.0
        %845 = vmatpush1.xpose.msra.mxu0 0.0
        %846 = vmatprep.subr.mxu0 0.0
        %847 = vmatpush1.xpose.msra.mxu0 0.0
        %848 = vmatprep.subr.mxu0 0.0
        %849 = vmatpush1.xpose.msra.mxu0 0.0
        %850 = vmatprep.subr.mxu0 0.0
        %851 = vmatpush1.xpose.msra.mxu0 0.0
        %852 = vmatprep.subr.mxu0 0.0
        %853 = vmatpush1.xpose.msra.mxu0 0.0
        %854 = vmatprep.subr.mxu0 0.0
        %855 = vmatpush1.xpose.msra.mxu0 0.0
        %856 = vmatprep.subr.mxu0 0.0
        %857 = vmatpush1.xpose.msra.mxu0 0.0
        %858 = vmatprep.subr.mxu0 0.0
        %859 = vmatpush1.xpose.msra.mxu0 %v828
        %860 = vmatprep.subr.mxu0 0.0
        %861 = vmatpush1.xpose.msra.mxu0 %v826
        %862 = vmatprep.subr.mxu0 0.0
        %863 = vmatpush2.xpose.msra.mxu0 0.0
        %864 = vmatprep.subr.mxu0 0.0
        %865 = vmatpush2.xpose.msra.mxu0 0.0
        %866 = vmatprep.subr.mxu0 0.0
        %867 = vmatpush2.xpose.msra.mxu0 0.0
        %868 = vmatprep.subr.mxu0 0.0
        %869 = vmatpush2.xpose.msra.mxu0 0.0
        %870 = vmatprep.subr.mxu0 0.0
        %871 = vmatpush2.xpose.msra.mxu0 0.0
        %872 = vmatprep.subr.mxu0 0.0
        %873 = vmatpush2.xpose.msra.mxu0 0.0
        %874 = vmatprep.subr.mxu0 0.0
        %875 = vmatpush2.xpose.msra.mxu0 0.0
        %876 = vmatprep.subr.mxu0 0.0
        %877 = vmatpush2.xpose.msra.mxu0 0.0
        %878 = vmatprep.subr.mxu0 0.0
        %879 = vmatpush2.xpose.msra.mxu0 0.0
        %880 = vmatprep.subr.mxu0 0.0
        %881 = vmatpush2.xpose.msra.mxu0 0.0
        %882 = vmatprep.subr.mxu0 0.0
        %883 = vmatpush2.xpose.msra.mxu0 0.0
        %884 = vmatprep.subr.mxu0 0.0
        %885 = vmatpush2.xpose.msra.mxu0 0.0
        %886 = vmatprep.subr.mxu0 0.0
        %887 = vmatpush2.xpose.msra.mxu0 0.0
        %888 = vmatprep.subr.mxu0 0.0
        %889 = vmatpush2.xpose.msra.mxu0 0.0
        %890 = vmatprep.subr.mxu0 0.0
        %891 = vmatpush2.xpose.msra.mxu0 0.0
        %892 = vmatprep.subr.mxu0 0.0
        %893 = vmatpush2.xpose.msra.mxu0 0.0
        %894 = vmatprep.mubr.f32.mxu0 0.0
        %895 = vmatmul.mubr.f32.gmra.mxu0 %v822
        %v896 = vpop.f32.mrf.mxu0
        %v897 = vadd.f32 0.0, %v896
        %v898 = vpop.f32.mrf.mxu0
        %899 = vmatprep.mubr.f32.mxu0 0.0
        %900 = vmatmul.mubr.f32.gmra.mxu0 %v824
        %v901 = vpop.f32.mrf.mxu0
        %v902 = vadd.f32 0.0, %v901
        %v903 = vpop.f32.mrf.mxu0
        %904 = vdwg.mxu0
        %907 = vrot.lane.b32.xlu0 %v715, 16
        %v908 = vpop.permute.xlu0 %907
        %909 = vrot.lane.b32.xlu0 %v720, 16
        %v910 = vpop.permute.xlu0 %909
        %915 = vrot.lane.b32.xlu0 %v806, 32
        %v916 = vpop.permute.xlu0 %915
        %917 = vrot.lane.b32.xlu0 %v811, 32
        %v918 = vpop.permute.xlu0 %917
        %923 = vrot.lane.b32.xlu0 %v897, 48
        %v924 = vpop.permute.xlu0 %923
        %925 = vrot.lane.b32.xlu0 %v902, 48
        %v926 = vpop.permute.xlu0 %925
        %v929 = vsel %vm548, %v624, %v908
        %v930 = vsel %vm548, %v629, %v910
        %v931 = vsel %vm370, %v929, %v916
        %v932 = vsel %vm370, %v930, %v918
        %vm933 = vcmask 392192
        %v934 = vsel %vm933, %v931, %v924
        %v935 = vsel %vm933, %v932, %v926
        %938 = vrot.lane.b32.xlu0 %v934, 64
        %v939 = vpop.permute.xlu0 %938
        %940 = vrot.lane.b32.xlu0 %v935, 64
        %v941 = vpop.permute.xlu0 %940
        %v944 = vsel %vm462, %v536, %v939
        %v945 = vsel %vm462, %v541, %v941
        %v946 = vmax.f32 %v944, %v945
        %v947 = vrot.slane %v946, 4
        %v948 = vmax.f32 %v946, %v947
        %v949 = vrot.slane %v948, 2
        %v950 = vmax.f32 %v948, %v949
        %v951 = vrot.slane %v950, 1
        %v952 = vmax.f32 %v950, %v951
        %v953 = vsub.f32 %v944, %v952
        %v954 = vsub.f32 %v945, %v952
        %v955 = vmul.f32 %v953, 1.442695
        %v956 = vpow.pop %v955
        %v957 = vmul.f32 %v954, 1.442695
        %v958 = vpow.pop %v957
        %v959 = vadd.f32 %v956, %v958
        %v960 = vrot.slane %v959, 4
        %v961 = vadd.f32 %v959, %v960
        %v962 = vrot.slane %v961, 2
        %v963 = vadd.f32 %v961, %v962
        %v964 = vrot.slane %v963, 1
        %v965 = vadd.f32 %v963, %v964
        %v966 = vrcp.pop %v965
        %v967 = vmul.f32 %v956, %v966
        %v968 = vmul.f32 %v958, %v966
        %v969 = vld [vmem:[#allocation7] sm:$0xff]
        %v970 = vld [vmem:[#allocation7 + $0x8] sm:$0xff]
        %v971 = vld [vmem:[#allocation7 + $0x10] sm:$0xff]
        %v972 = vld [vmem:[#allocation7 + $0x18] sm:$0xff]
        %v973 = vld [vmem:[#allocation7 + $0x20] sm:$0xff]
        %v974 = vld [vmem:[#allocation7 + $0x28] sm:$0xff]
        %v975 = vld [vmem:[#allocation7 + $0x30] sm:$0xff]
        %v976 = vld [vmem:[#allocation7 + $0x38] sm:$0xff]
        %v977 = vld [vmem:[#allocation7 + $0x40] sm:$0xff]
        %v978 = vld [vmem:[#allocation7 + $0x48] sm:$0xff]
        %v979 = vld [vmem:[#allocation7 + $0x50] sm:$0xff]
        %v980 = vld [vmem:[#allocation7 + $0x58] sm:$0xff]
        %v981 = vld [vmem:[#allocation7 + $0x60] sm:$0xff]
        %v982 = vld [vmem:[#allocation7 + $0x68] sm:$0xff]
        %v983 = vld [vmem:[#allocation7 + $0x70] sm:$0xff]
        %v984 = vld [vmem:[#allocation7 + $0x78] sm:$0xff]
        %985 = vmatprep.subr.mxu0 0.0
        %986 = vmatpush1.msra.mxu0 %v984
        %987 = vmatprep.subr.mxu0 0.0
        %988 = vmatpush1.msra.mxu0 %v983
        %989 = vmatprep.subr.mxu0 0.0
        %990 = vmatpush1.msra.mxu0 %v982
        %991 = vmatprep.subr.mxu0 0.0
        %992 = vmatpush1.msra.mxu0 %v981
        %993 = vmatprep.subr.mxu0 0.0
        %994 = vmatpush1.msra.mxu0 %v980
        %995 = vmatprep.subr.mxu0 0.0
        %996 = vmatpush1.msra.mxu0 %v979
        %997 = vmatprep.subr.mxu0 0.0
        %998 = vmatpush1.msra.mxu0 %v978
        %999 = vmatprep.subr.mxu0 0.0
        %1000 = vmatpush1.msra.mxu0 %v977
        %1001 = vmatprep.subr.mxu0 0.0
        %1002 = vmatpush1.msra.mxu0 %v976
        %1003 = vmatprep.subr.mxu0 0.0
        %1004 = vmatpush1.msra.mxu0 %v975
        %1005 = vmatprep.subr.mxu0 0.0
        %1006 = vmatpush1.msra.mxu0 %v974
        %1007 = vmatprep.subr.mxu0 0.0
        %1008 = vmatpush1.msra.mxu0 %v973
        %1009 = vmatprep.subr.mxu0 0.0
        %1010 = vmatpush1.msra.mxu0 %v972
        %1011 = vmatprep.subr.mxu0 0.0
        %1012 = vmatpush1.msra.mxu0 %v971
        %1013 = vmatprep.subr.mxu0 0.0
        %1014 = vmatpush1.msra.mxu0 %v970
        %1015 = vmatprep.subr.mxu0 0.0
        %1016 = vmatpush1.msra.mxu0 %v969
        %1017 = vmatprep.subr.mxu0 0.0
        %1018 = vmatpush2.msra.mxu0 0.0
        %1019 = vmatprep.subr.mxu0 0.0
        %1020 = vmatpush2.msra.mxu0 0.0
        %1021 = vmatprep.subr.mxu0 0.0
        %1022 = vmatpush2.msra.mxu0 0.0
        %1023 = vmatprep.subr.mxu0 0.0
        %1024 = vmatpush2.msra.mxu0 0.0
        %1025 = vmatprep.subr.mxu0 0.0
        %1026 = vmatpush2.msra.mxu0 0.0
        %1027 = vmatprep.subr.mxu0 0.0
        %1028 = vmatpush2.msra.mxu0 0.0
        %1029 = vmatprep.subr.mxu0 0.0
        %1030 = vmatpush2.msra.mxu0 0.0
        %1031 = vmatprep.subr.mxu0 0.0
        %1032 = vmatpush2.msra.mxu0 0.0
        %1033 = vmatprep.subr.mxu0 0.0
        %1034 = vmatpush2.msra.mxu0 0.0
        %1035 = vmatprep.subr.mxu0 0.0
        %1036 = vmatpush2.msra.mxu0 0.0
        %1037 = vmatprep.subr.mxu0 0.0
        %1038 = vmatpush2.msra.mxu0 0.0
        %1039 = vmatprep.subr.mxu0 0.0
        %1040 = vmatpush2.msra.mxu0 0.0
        %1041 = vmatprep.subr.mxu0 0.0
        %1042 = vmatpush2.msra.mxu0 0.0
        %1043 = vmatprep.subr.mxu0 0.0
        %1044 = vmatpush2.msra.mxu0 0.0
        %1045 = vmatprep.subr.mxu0 0.0
        %1046 = vmatpush2.msra.mxu0 0.0
        %1047 = vmatprep.subr.mxu0 0.0
        %1048 = vmatpush2.msra.mxu0 0.0
        %1049 = vmatprep.mubr.f32.mxu0 0.0
        %1050 = vmatmul.mubr.f32.gmra.mxu0 %v967
        %v1051 = vpop.f32.mrf.mxu0
        %v1052 = vadd.f32 1e-09, %v1051
        %v1053 = vpop.f32.mrf.mxu0
        %1054 = vmatprep.mubr.f32.mxu0 0.0
        %1055 = vmatmul.mubr.f32.gmra.mxu0 %v968
        %v1056 = vpop.f32.mrf.mxu0
        %v1057 = vadd.f32 1e-09, %v1056
        %v1058 = vpop.f32.mrf.mxu0
        %1059 = vdwg.mxu0
        %v1060 = vrcp.pop %v1052
        %v1061 = vrcp.pop %v1057
        %v1062 = vmul.f32 %v967, %v1060
        %v1063 = vmul.f32 %v968, %v1061
        %1066 = vrot.lane.b32.xlu0 %v1062, 64
        %v1067 = vpop.permute.xlu0 %1066
        %1068 = vrot.lane.b32.xlu0 %v1063, 64
        %v1069 = vpop.permute.xlu0 %1068
        %v1072 = vadd.f32 %v1062, %v1067
        %v1073 = vadd.f32 %v1063, %v1069
        %v1074 = vld [vmem:[#allocation5] sm:$0xff]
        %v1075 = vld [vmem:[#allocation5 + $0x8] sm:$0xff]
        %v1076 = vld [vmem:[#allocation5 + $0x10] sm:$0xff]
        %v1077 = vld [vmem:[#allocation5 + $0x18] sm:$0xff]
        %v1078 = vld [vmem:[#allocation5 + $0x20] sm:$0xff]
        %v1079 = vld [vmem:[#allocation5 + $0x28] sm:$0xff]
        %v1080 = vld [vmem:[#allocation5 + $0x30] sm:$0xff]
        %v1081 = vld [vmem:[#allocation5 + $0x38] sm:$0xff]
        %v1082 = vsel %vm548, %v1062, 0
        %v1084 = vsel %vm548, %v1063, 0
        %1086 = vmatprep.subr.mxu0 0.0
        %1087 = vmatpush1.msra.mxu0 0.0
        %1088 = vmatprep.subr.mxu0 0.0
        %1089 = vmatpush1.msra.mxu0 0.0
        %1090 = vmatprep.subr.mxu0 0.0
        %1091 = vmatpush1.msra.mxu0 0.0
        %1092 = vmatprep.subr.mxu0 0.0
        %1093 = vmatpush1.msra.mxu0 0.0
        %1094 = vmatprep.subr.mxu0 0.0
        %1095 = vmatpush1.msra.mxu0 0.0
        %1096 = vmatprep.subr.mxu0 0.0
        %1097 = vmatpush1.msra.mxu0 0.0
        %1098 = vmatprep.subr.mxu0 0.0
        %1099 = vmatpush1.msra.mxu0 0.0
        %1100 = vmatprep.subr.mxu0 0.0
        %1101 = vmatpush1.msra.mxu0 0.0
        %1102 = vmatprep.subr.mxu0 0.0
        %1103 = vmatpush1.msra.mxu0 0.0
        %1104 = vmatprep.subr.mxu0 0.0
        %1105 = vmatpush1.msra.mxu0 0.0
        %1106 = vmatprep.subr.mxu0 0.0
        %1107 = vmatpush1.msra.mxu0 0.0
        %1108 = vmatprep.subr.mxu0 0.0
        %1109 = vmatpush1.msra.mxu0 0.0
        %1110 = vmatprep.subr.mxu0 0.0
        %1111 = vmatpush1.msra.mxu0 0.0
        %1112 = vmatprep.subr.mxu0 0.0
        %1113 = vmatpush1.msra.mxu0 0.0
        %1114 = vmatprep.subr.mxu0 0.0
        %1115 = vmatpush1.msra.mxu0 %v452
        %1116 = vmatprep.subr.mxu0 0.0
        %1117 = vmatpush1.msra.mxu0 %v446
        %1118 = vmatprep.subr.mxu0 0.0
        %1119 = vmatpush2.msra.mxu0 0.0
        %1120 = vmatprep.subr.mxu0 0.0
        %1121 = vmatpush2.msra.mxu0 0.0
        %1122 = vmatprep.subr.mxu0 0.0
        %1123 = vmatpush2.msra.mxu0 0.0
        %1124 = vmatprep.subr.mxu0 0.0
        %1125 = vmatpush2.msra.mxu0 0.0
        %1126 = vmatprep.subr.mxu0 0.0
        %1127 = vmatpush2.msra.mxu0 0.0
        %1128 = vmatprep.subr.mxu0 0.0
        %1129 = vmatpush2.msra.mxu0 0.0
        %1130 = vmatprep.subr.mxu0 0.0
        %1131 = vmatpush2.msra.mxu0 0.0
        %1132 = vmatprep.subr.mxu0 0.0
        %1133 = vmatpush2.msra.mxu0 0.0
        %1134 = vmatprep.subr.mxu0 0.0
        %1135 = vmatpush2.msra.mxu0 0.0
        %1136 = vmatprep.subr.mxu0 0.0
        %1137 = vmatpush2.msra.mxu0 0.0
        %1138 = vmatprep.subr.mxu0 0.0
        %1139 = vmatpush2.msra.mxu0 0.0
        %1140 = vmatprep.subr.mxu0 0.0
        %1141 = vmatpush2.msra.mxu0 0.0
        %1142 = vmatprep.subr.mxu0 0.0
        %1143 = vmatpush2.msra.mxu0 0.0
        %1144 = vmatprep.subr.mxu0 0.0
        %1145 = vmatpush2.msra.mxu0 0.0
        %1146 = vmatprep.subr.mxu0 0.0
        %1147 = vmatpush2.msra.mxu0 0.0
        %1148 = vmatprep.subr.mxu0 0.0
        %1149 = vmatpush2.msra.mxu0 0.0
        %1150 = vmatprep.mubr.f32.mxu0 0.0
        %1151 = vmatmul.mubr.f32.gmra.mxu0 %v1082
        %v1152 = vpop.f32.mrf.mxu0
        %v1153 = vadd.f32 0.0, %v1152
        %v1154 = vpop.f32.mrf.mxu0
        %1155 = vmatprep.mubr.f32.mxu0 0.0
        %1156 = vmatmul.mubr.f32.gmra.mxu0 %v1084
        %v1157 = vpop.f32.mrf.mxu0
        %v1158 = vadd.f32 0.0, %v1157
        %v1159 = vpop.f32.mrf.mxu0
        %1160 = vdwg.mxu0
        %1161 = vrot.lane.b32.xlu0 %v1062, 112
        %v1162 = vpop.permute.xlu0 %1161
        %1163 = vrot.lane.b32.xlu0 %v1063, 112
        %v1164 = vpop.permute.xlu0 %1163
        %1167 = vrot.lane.b32.xlu0 %v446, 112
        %v1168 = vpop.permute.xlu0 %1167
        %1169 = vrot.lane.b32.xlu0 %v452, 112
        %v1170 = vpop.permute.xlu0 %1169
        %v1173 = vsel %vm548, %v1162, 0
        %v1175 = vsel %vm548, %v1164, 0
        %1177 = vmatprep.subr.mxu0 0.0
        %1178 = vmatpush1.msra.mxu0 0.0
        %1179 = vmatprep.subr.mxu0 0.0
        %1180 = vmatpush1.msra.mxu0 0.0
        %1181 = vmatprep.subr.mxu0 0.0
        %1182 = vmatpush1.msra.mxu0 0.0
        %1183 = vmatprep.subr.mxu0 0.0
        %1184 = vmatpush1.msra.mxu0 0.0
        %1185 = vmatprep.subr.mxu0 0.0
        %1186 = vmatpush1.msra.mxu0 0.0
        %1187 = vmatprep.subr.mxu0 0.0
        %1188 = vmatpush1.msra.mxu0 0.0
        %1189 = vmatprep.subr.mxu0 0.0
        %1190 = vmatpush1.msra.mxu0 0.0
        %1191 = vmatprep.subr.mxu0 0.0
        %1192 = vmatpush1.msra.mxu0 0.0
        %1193 = vmatprep.subr.mxu0 0.0
        %1194 = vmatpush1.msra.mxu0 0.0
        %1195 = vmatprep.subr.mxu0 0.0
        %1196 = vmatpush1.msra.mxu0 0.0
        %1197 = vmatprep.subr.mxu0 0.0
        %1198 = vmatpush1.msra.mxu0 0.0
        %1199 = vmatprep.subr.mxu0 0.0
        %1200 = vmatpush1.msra.mxu0 0.0
        %1201 = vmatprep.subr.mxu0 0.0
        %1202 = vmatpush1.msra.mxu0 0.0
        %1203 = vmatprep.subr.mxu0 0.0
        %1204 = vmatpush1.msra.mxu0 0.0
        %1205 = vmatprep.subr.mxu0 0.0
        %1206 = vmatpush1.msra.mxu0 %v1170
        %1207 = vmatprep.subr.mxu0 0.0
        %1208 = vmatpush1.msra.mxu0 %v1168
        %1209 = vmatprep.subr.mxu0 0.0
        %1210 = vmatpush2.msra.mxu0 0.0
        %1211 = vmatprep.subr.mxu0 0.0
        %1212 = vmatpush2.msra.mxu0 0.0
        %1213 = vmatprep.subr.mxu0 0.0
        %1214 = vmatpush2.msra.mxu0 0.0
        %1215 = vmatprep.subr.mxu0 0.0
        %1216 = vmatpush2.msra.mxu0 0.0
        %1217 = vmatprep.subr.mxu0 0.0
        %1218 = vmatpush2.msra.mxu0 0.0
        %1219 = vmatprep.subr.mxu0 0.0
        %1220 = vmatpush2.msra.mxu0 0.0
        %1221 = vmatprep.subr.mxu0 0.0
        %1222 = vmatpush2.msra.mxu0 0.0
        %1223 = vmatprep.subr.mxu0 0.0
        %1224 = vmatpush2.msra.mxu0 0.0
        %1225 = vmatprep.subr.mxu0 0.0
        %1226 = vmatpush2.msra.mxu0 0.0
        %1227 = vmatprep.subr.mxu0 0.0
        %1228 = vmatpush2.msra.mxu0 0.0
        %1229 = vmatprep.subr.mxu0 0.0
        %1230 = vmatpush2.msra.mxu0 0.0
        %1231 = vmatprep.subr.mxu0 0.0
        %1232 = vmatpush2.msra.mxu0 0.0
        %1233 = vmatprep.subr.mxu0 0.0
        %1234 = vmatpush2.msra.mxu0 0.0
        %1235 = vmatprep.subr.mxu0 0.0
        %1236 = vmatpush2.msra.mxu0 0.0
        %1237 = vmatprep.subr.mxu0 0.0
        %1238 = vmatpush2.msra.mxu0 0.0
        %1239 = vmatprep.subr.mxu0 0.0
        %1240 = vmatpush2.msra.mxu0 0.0
        %1241 = vmatprep.mubr.f32.mxu0 0.0
        %1242 = vmatmul.mubr.f32.gmra.mxu0 %v1173
        %v1243 = vpop.f32.mrf.mxu0
        %v1244 = vadd.f32 0.0, %v1243
        %v1245 = vpop.f32.mrf.mxu0
        %1246 = vmatprep.mubr.f32.mxu0 0.0
        %1247 = vmatmul.mubr.f32.gmra.mxu0 %v1175
        %v1248 = vpop.f32.mrf.mxu0
        %v1249 = vadd.f32 0.0, %v1248
        %v1250 = vpop.f32.mrf.mxu0
        %1251 = vdwg.mxu0
        %1252 = vrot.lane.b32.xlu0 %v1062, 96
        %v1253 = vpop.permute.xlu0 %1252
        %1254 = vrot.lane.b32.xlu0 %v1063, 96
        %v1255 = vpop.permute.xlu0 %1254
        %1256 = vrot.lane.b32.xlu0 %v446, 96
        %v1257 = vpop.permute.xlu0 %1256
        %1258 = vrot.lane.b32.xlu0 %v452, 96
        %v1259 = vpop.permute.xlu0 %1258
        %v1262 = vsel %vm548, %v1253, 0
        %v1264 = vsel %vm548, %v1255, 0
        %1266 = vmatprep.subr.mxu0 0.0
        %1267 = vmatpush1.msra.mxu0 0.0
        %1268 = vmatprep.subr.mxu0 0.0
        %1269 = vmatpush1.msra.mxu0 0.0
        %1270 = vmatprep.subr.mxu0 0.0
        %1271 = vmatpush1.msra.mxu0 0.0
        %1272 = vmatprep.subr.mxu0 0.0
        %1273 = vmatpush1.msra.mxu0 0.0
        %1274 = vmatprep.subr.mxu0 0.0
        %1275 = vmatpush1.msra.mxu0 0.0
        %1276 = vmatprep.subr.mxu0 0.0
        %1277 = vmatpush1.msra.mxu0 0.0
        %1278 = vmatprep.subr.mxu0 0.0
        %1279 = vmatpush1.msra.mxu0 0.0
        %1280 = vmatprep.subr.mxu0 0.0
        %1281 = vmatpush1.msra.mxu0 0.0
        %1282 = vmatprep.subr.mxu0 0.0
        %1283 = vmatpush1.msra.mxu0 0.0
        %1284 = vmatprep.subr.mxu0 0.0
        %1285 = vmatpush1.msra.mxu0 0.0
        %1286 = vmatprep.subr.mxu0 0.0
        %1287 = vmatpush1.msra.mxu0 0.0
        %1288 = vmatprep.subr.mxu0 0.0
        %1289 = vmatpush1.msra.mxu0 0.0
        %1290 = vmatprep.subr.mxu0 0.0
        %1291 = vmatpush1.msra.mxu0 0.0
        %1292 = vmatprep.subr.mxu0 0.0
        %1293 = vmatpush1.msra.mxu0 0.0
        %1294 = vmatprep.subr.mxu0 0.0
        %1295 = vmatpush1.msra.mxu0 %v1259
        %1296 = vmatprep.subr.mxu0 0.0
        %1297 = vmatpush1.msra.mxu0 %v1257
        %1298 = vmatprep.subr.mxu0 0.0
        %1299 = vmatpush2.msra.mxu0 0.0
        %1300 = vmatprep.subr.mxu0 0.0
        %1301 = vmatpush2.msra.mxu0 0.0
        %1302 = vmatprep.subr.mxu0 0.0
        %1303 = vmatpush2.msra.mxu0 0.0
        %1304 = vmatprep.subr.mxu0 0.0
        %1305 = vmatpush2.msra.mxu0 0.0
        %1306 = vmatprep.subr.mxu0 0.0
        %1307 = vmatpush2.msra.mxu0 0.0
        %1308 = vmatprep.subr.mxu0 0.0
        %1309 = vmatpush2.msra.mxu0 0.0
        %1310 = vmatprep.subr.mxu0 0.0
        %1311 = vmatpush2.msra.mxu0 0.0
        %1312 = vmatprep.subr.mxu0 0.0
        %1313 = vmatpush2.msra.mxu0 0.0
        %1314 = vmatprep.subr.mxu0 0.0
        %1315 = vmatpush2.msra.mxu0 0.0
        %1316 = vmatprep.subr.mxu0 0.0
        %1317 = vmatpush2.msra.mxu0 0.0
        %1318 = vmatprep.subr.mxu0 0.0
        %1319 = vmatpush2.msra.mxu0 0.0
        %1320 = vmatprep.subr.mxu0 0.0
        %1321 = vmatpush2.msra.mxu0 0.0
        %1322 = vmatprep.subr.mxu0 0.0
        %1323 = vmatpush2.msra.mxu0 0.0
        %1324 = vmatprep.subr.mxu0 0.0
        %1325 = vmatpush2.msra.mxu0 0.0
        %1326 = vmatprep.subr.mxu0 0.0
        %1327 = vmatpush2.msra.mxu0 0.0
        %1328 = vmatprep.subr.mxu0 0.0
        %1329 = vmatpush2.msra.mxu0 0.0
        %1330 = vmatprep.mubr.f32.mxu0 0.0
        %1331 = vmatmul.mubr.f32.gmra.mxu0 %v1262
        %v1332 = vpop.f32.mrf.mxu0
        %v1333 = vadd.f32 0.0, %v1332
        %v1334 = vpop.f32.mrf.mxu0
        %1335 = vmatprep.mubr.f32.mxu0 0.0
        %1336 = vmatmul.mubr.f32.gmra.mxu0 %v1264
        %v1337 = vpop.f32.mrf.mxu0
        %v1338 = vadd.f32 0.0, %v1337
        %v1339 = vpop.f32.mrf.mxu0
        %1340 = vdwg.mxu0
        %1341 = vrot.lane.b32.xlu0 %v1062, 80
        %v1342 = vpop.permute.xlu0 %1341
        %1343 = vrot.lane.b32.xlu0 %v1063, 80
        %v1344 = vpop.permute.xlu0 %1343
        %1345 = vrot.lane.b32.xlu0 %v446, 80
        %v1346 = vpop.permute.xlu0 %1345
        %1347 = vrot.lane.b32.xlu0 %v452, 80
        %v1348 = vpop.permute.xlu0 %1347
        %v1351 = vsel %vm548, %v1342, 0
        %v1353 = vsel %vm548, %v1344, 0
        %1355 = vmatprep.subr.mxu0 0.0
        %1356 = vmatpush1.msra.mxu0 0.0
        %1357 = vmatprep.subr.mxu0 0.0
        %1358 = vmatpush1.msra.mxu0 0.0
        %1359 = vmatprep.subr.mxu0 0.0
        %1360 = vmatpush1.msra.mxu0 0.0
        %1361 = vmatprep.subr.mxu0 0.0
        %1362 = vmatpush1.msra.mxu0 0.0
        %1363 = vmatprep.subr.mxu0 0.0
        %1364 = vmatpush1.msra.mxu0 0.0
        %1365 = vmatprep.subr.mxu0 0.0
        %1366 = vmatpush1.msra.mxu0 0.0
        %1367 = vmatprep.subr.mxu0 0.0
        %1368 = vmatpush1.msra.mxu0 0.0
        %1369 = vmatprep.subr.mxu0 0.0
        %1370 = vmatpush1.msra.mxu0 0.0
        %1371 = vmatprep.subr.mxu0 0.0
        %1372 = vmatpush1.msra.mxu0 0.0
        %1373 = vmatprep.subr.mxu0 0.0
        %1374 = vmatpush1.msra.mxu0 0.0
        %1375 = vmatprep.subr.mxu0 0.0
        %1376 = vmatpush1.msra.mxu0 0.0
        %1377 = vmatprep.subr.mxu0 0.0
        %1378 = vmatpush1.msra.mxu0 0.0
        %1379 = vmatprep.subr.mxu0 0.0
        %1380 = vmatpush1.msra.mxu0 0.0
        %1381 = vmatprep.subr.mxu0 0.0
        %1382 = vmatpush1.msra.mxu0 0.0
        %1383 = vmatprep.subr.mxu0 0.0
        %1384 = vmatpush1.msra.mxu0 %v1348
        %1385 = vmatprep.subr.mxu0 0.0
        %1386 = vmatpush1.msra.mxu0 %v1346
        %1387 = vmatprep.subr.mxu0 0.0
        %1388 = vmatpush2.msra.mxu0 0.0
        %1389 = vmatprep.subr.mxu0 0.0
        %1390 = vmatpush2.msra.mxu0 0.0
        %1391 = vmatprep.subr.mxu0 0.0
        %1392 = vmatpush2.msra.mxu0 0.0
        %1393 = vmatprep.subr.mxu0 0.0
        %1394 = vmatpush2.msra.mxu0 0.0
        %1395 = vmatprep.subr.mxu0 0.0
        %1396 = vmatpush2.msra.mxu0 0.0
        %1397 = vmatprep.subr.mxu0 0.0
        %1398 = vmatpush2.msra.mxu0 0.0
        %1399 = vmatprep.subr.mxu0 0.0
        %1400 = vmatpush2.msra.mxu0 0.0
        %1401 = vmatprep.subr.mxu0 0.0
        %1402 = vmatpush2.msra.mxu0 0.0
        %1403 = vmatprep.subr.mxu0 0.0
        %1404 = vmatpush2.msra.mxu0 0.0
        %1405 = vmatprep.subr.mxu0 0.0
        %1406 = vmatpush2.msra.mxu0 0.0
        %1407 = vmatprep.subr.mxu0 0.0
        %1408 = vmatpush2.msra.mxu0 0.0
        %1409 = vmatprep.subr.mxu0 0.0
        %1410 = vmatpush2.msra.mxu0 0.0
        %1411 = vmatprep.subr.mxu0 0.0
        %1412 = vmatpush2.msra.mxu0 0.0
        %1413 = vmatprep.subr.mxu0 0.0
        %1414 = vmatpush2.msra.mxu0 0.0
        %1415 = vmatprep.subr.mxu0 0.0
        %1416 = vmatpush2.msra.mxu0 0.0
        %1417 = vmatprep.subr.mxu0 0.0
        %1418 = vmatpush2.msra.mxu0 0.0
        %1419 = vmatprep.mubr.f32.mxu0 0.0
        %1420 = vmatmul.mubr.f32.gmra.mxu0 %v1351
        %v1421 = vpop.f32.mrf.mxu0
        %v1422 = vadd.f32 0.0, %v1421
        %v1423 = vpop.f32.mrf.mxu0
        %1424 = vmatprep.mubr.f32.mxu0 0.0
        %1425 = vmatmul.mubr.f32.gmra.mxu0 %v1353
        %v1426 = vpop.f32.mrf.mxu0
        %v1427 = vadd.f32 0.0, %v1426
        %v1428 = vpop.f32.mrf.mxu0
        %1429 = vdwg.mxu0
        %1432 = vrot.lane.b32.xlu0 %v1244, 16
        %v1433 = vpop.permute.xlu0 %1432
        %1434 = vrot.lane.b32.xlu0 %v1249, 16
        %v1435 = vpop.permute.xlu0 %1434
        %1440 = vrot.lane.b32.xlu0 %v1333, 32
        %v1441 = vpop.permute.xlu0 %1440
        %1442 = vrot.lane.b32.xlu0 %v1338, 32
        %v1443 = vpop.permute.xlu0 %1442
        %1448 = vrot.lane.b32.xlu0 %v1422, 48
        %v1449 = vpop.permute.xlu0 %1448
        %1450 = vrot.lane.b32.xlu0 %v1427, 48
        %v1451 = vpop.permute.xlu0 %1450
        %v1454 = vsel %vm548, %v1153, %v1433
        %v1455 = vsel %vm548, %v1158, %v1435
        %v1456 = vsel %vm370, %v1454, %v1441
        %v1457 = vsel %vm370, %v1455, %v1443
        %v1458 = vsel %vm933, %v1456, %v1449
        %v1459 = vsel %vm933, %v1457, %v1451
        %v1461 = vsel %vm462, %v1072, 0
        %v1464 = vsel %vm462, %v1073, 0
        %1466 = vmatprep.subr.mxu0 0.0
        %1467 = vmatpush1.msra.mxu0 0.0
        %1468 = vmatprep.subr.mxu0 0.0
        %1469 = vmatpush1.msra.mxu0 0.0
        %1470 = vmatprep.subr.mxu0 0.0
        %1471 = vmatpush1.msra.mxu0 0.0
        %1472 = vmatprep.subr.mxu0 0.0
        %1473 = vmatpush1.msra.mxu0 0.0
        %1474 = vmatprep.subr.mxu0 0.0
        %1475 = vmatpush1.msra.mxu0 0.0
        %1476 = vmatprep.subr.mxu0 0.0
        %1477 = vmatpush1.msra.mxu0 0.0
        %1478 = vmatprep.subr.mxu0 0.0
        %1479 = vmatpush1.msra.mxu0 0.0
        %1480 = vmatprep.subr.mxu0 0.0
        %1481 = vmatpush1.msra.mxu0 0.0
        %1482 = vmatprep.subr.mxu0 0.0
        %1483 = vmatpush1.msra.mxu0 %v1081
        %1484 = vmatprep.subr.mxu0 0.0
        %1485 = vmatpush1.msra.mxu0 %v1080
        %1486 = vmatprep.subr.mxu0 0.0
        %1487 = vmatpush1.msra.mxu0 %v1079
        %1488 = vmatprep.subr.mxu0 0.0
        %1489 = vmatpush1.msra.mxu0 %v1078
        %1490 = vmatprep.subr.mxu0 0.0
        %1491 = vmatpush1.msra.mxu0 %v1077
        %1492 = vmatprep.subr.mxu0 0.0
        %1493 = vmatpush1.msra.mxu0 %v1076
        %1494 = vmatprep.subr.mxu0 0.0
        %1495 = vmatpush1.msra.mxu0 %v1075
        %1496 = vmatprep.subr.mxu0 0.0
        %1497 = vmatpush1.msra.mxu0 %v1074
        %1498 = vmatprep.subr.mxu0 0.0
        %1499 = vmatpush2.msra.mxu0 0.0
        %1500 = vmatprep.subr.mxu0 0.0
        %1501 = vmatpush2.msra.mxu0 0.0
        %1502 = vmatprep.subr.mxu0 0.0
        %1503 = vmatpush2.msra.mxu0 0.0
        %1504 = vmatprep.subr.mxu0 0.0
        %1505 = vmatpush2.msra.mxu0 0.0
        %1506 = vmatprep.subr.mxu0 0.0
        %1507 = vmatpush2.msra.mxu0 0.0
        %1508 = vmatprep.subr.mxu0 0.0
        %1509 = vmatpush2.msra.mxu0 0.0
        %1510 = vmatprep.subr.mxu0 0.0
        %1511 = vmatpush2.msra.mxu0 0.0
        %1512 = vmatprep.subr.mxu0 0.0
        %1513 = vmatpush2.msra.mxu0 0.0
        %1514 = vmatprep.subr.mxu0 0.0
        %1515 = vmatpush2.msra.mxu0 0.0
        %1516 = vmatprep.subr.mxu0 0.0
        %1517 = vmatpush2.msra.mxu0 0.0
        %1518 = vmatprep.subr.mxu0 0.0
        %1519 = vmatpush2.msra.mxu0 0.0
        %1520 = vmatprep.subr.mxu0 0.0
        %1521 = vmatpush2.msra.mxu0 0.0
        %1522 = vmatprep.subr.mxu0 0.0
        %1523 = vmatpush2.msra.mxu0 0.0
        %1524 = vmatprep.subr.mxu0 0.0
        %1525 = vmatpush2.msra.mxu0 0.0
        %1526 = vmatprep.subr.mxu0 0.0
        %1527 = vmatpush2.msra.mxu0 0.0
        %1528 = vmatprep.subr.mxu0 0.0
        %1529 = vmatpush2.msra.mxu0 0.0
        %1530 = vmatprep.mubr.f32.mxu0 0.0
        %1531 = vmatmul.mubr.f32.gmra.mxu0 %v1461
        %v1532 = vpop.f32.mrf.mxu0
        %v1533 = vadd.f32 %v1458, %v1532
        %v1534 = vpop.f32.mrf.mxu0
        %1535 = vmatprep.mubr.f32.mxu0 0.0
        %1536 = vmatmul.mubr.f32.gmra.mxu0 %v1464
        %v1537 = vpop.f32.mrf.mxu0
        %v1538 = vadd.f32 %v1459, %v1537
        %v1539 = vpop.f32.mrf.mxu0
        %1540 = vdwg.mxu0
        %v1541 = vld [vmem:[%s6] sm:$0xff]
        %v1542 = vld [vmem:[%s6 + $0x8] sm:$0xff]
        %v1543 = vld [vmem:[%s6 + $0x10] sm:$0xff]
        %v1544 = vld [vmem:[%s6 + $0x18] sm:$0xff]
        %v1545 = vld [vmem:[%s6 + $0x20] sm:$0xff]
        %v1546 = vld [vmem:[%s6 + $0x28] sm:$0xff]
        %v1547 = vld [vmem:[%s6 + $0x30] sm:$0xff]
        %v1548 = vld [vmem:[%s6 + $0x38] sm:$0xff]
        %v1549 = vld [vmem:[%s7] sm:$0x1]
        %v1551 = vlaneseq
        %v1552 = vshrl.u32 %v1551, 7
        %v1553 = vsub.s32 0, %v1552
        %v1554 = vrot.slane %v1549, %v1553
        %v1557 = vsel %vm462, %v1533, 0
        %v1560 = vsel %vm462, %v1538, 0
        %1562 = vmatprep.subr.mxu0 0.0
        %1563 = vmatpush1.msra.mxu0 0.0
        %1564 = vmatprep.subr.mxu0 0.0
        %1565 = vmatpush1.msra.mxu0 0.0
        %1566 = vmatprep.subr.mxu0 0.0
        %1567 = vmatpush1.msra.mxu0 0.0
        %1568 = vmatprep.subr.mxu0 0.0
        %1569 = vmatpush1.msra.mxu0 0.0
        %1570 = vmatprep.subr.mxu0 0.0
        %1571 = vmatpush1.msra.mxu0 0.0
        %1572 = vmatprep.subr.mxu0 0.0
        %1573 = vmatpush1.msra.mxu0 0.0
        %1574 = vmatprep.subr.mxu0 0.0
        %1575 = vmatpush1.msra.mxu0 0.0
        %1576 = vmatprep.subr.mxu0 0.0
        %1577 = vmatpush1.msra.mxu0 0.0
        %1578 = vmatprep.subr.mxu0 0.0
        %1579 = vmatpush1.msra.mxu0 %v1548
        %1580 = vmatprep.subr.mxu0 0.0
        %1581 = vmatpush1.msra.mxu0 %v1547
        %1582 = vmatprep.subr.mxu0 0.0
        %1583 = vmatpush1.msra.mxu0 %v1546
        %1584 = vmatprep.subr.mxu0 0.0
        %1585 = vmatpush1.msra.mxu0 %v1545
        %1586 = vmatprep.subr.mxu0 0.0
        %1587 = vmatpush1.msra.mxu0 %v1544
        %1588 = vmatprep.subr.mxu0 0.0
        %1589 = vmatpush1.msra.mxu0 %v1543
        %1590 = vmatprep.subr.mxu0 0.0
        %1591 = vmatpush1.msra.mxu0 %v1542
        %1592 = vmatprep.subr.mxu0 0.0
        %1593 = vmatpush1.msra.mxu0 %v1541
        %1594 = vmatprep.subr.mxu0 0.0
        %1595 = vmatpush2.msra.mxu0 0.0
        %1596 = vmatprep.subr.mxu0 0.0
        %1597 = vmatpush2.msra.mxu0 0.0
        %1598 = vmatprep.subr.mxu0 0.0
        %1599 = vmatpush2.msra.mxu0 0.0
        %1600 = vmatprep.subr.mxu0 0.0
        %1601 = vmatpush2.msra.mxu0 0.0
        %1602 = vmatprep.subr.mxu0 0.0
        %1603 = vmatpush2.msra.mxu0 0.0
        %1604 = vmatprep.subr.mxu0 0.0
        %1605 = vmatpush2.msra.mxu0 0.0
        %1606 = vmatprep.subr.mxu0 0.0
        %1607 = vmatpush2.msra.mxu0 0.0
        %1608 = vmatprep.subr.mxu0 0.0
        %1609 = vmatpush2.msra.mxu0 0.0
        %1610 = vmatprep.subr.mxu0 0.0
        %1611 = vmatpush2.msra.mxu0 0.0
        %1612 = vmatprep.subr.mxu0 0.0
        %1613 = vmatpush2.msra.mxu0 0.0
        %1614 = vmatprep.subr.mxu0 0.0
        %1615 = vmatpush2.msra.mxu0 0.0
        %1616 = vmatprep.subr.mxu0 0.0
        %1617 = vmatpush2.msra.mxu0 0.0
        %1618 = vmatprep.subr.mxu0 0.0
        %1619 = vmatpush2.msra.mxu0 0.0
        %1620 = vmatprep.subr.mxu0 0.0
        %1621 = vmatpush2.msra.mxu0 0.0
        %1622 = vmatprep.subr.mxu0 0.0
        %1623 = vmatpush2.msra.mxu0 0.0
        %1624 = vmatprep.subr.mxu0 0.0
        %1625 = vmatpush2.msra.mxu0 0.0
        %1626 = vmatprep.mubr.f32.mxu0 0.0
        %1627 = vmatmul.mubr.f32.gmra.mxu0 %v1557
        %v1628 = vpop.f32.mrf.mxu0
        %v1629 = vadd.f32 %v1554, %v1628
        %v1630 = vpop.f32.mrf.mxu0
        %1631 = vmatprep.mubr.f32.mxu0 0.0
        %1632 = vmatmul.mubr.f32.gmra.mxu0 %v1560
        %v1633 = vpop.f32.mrf.mxu0
        %v1634 = vadd.f32 %v1554, %v1633
        %v1635 = vpop.f32.mrf.mxu0
        %1636 = vdwg.mxu0
        %v1637 = vadd.f32 %v348, %v1629
        %v1638 = vadd.f32 %v349, %v1634
        %v1639 = vmax.f32 %v1637, 0.0
        %v1640 = vmax.f32 %v1638, 0.0
        %1641 = vst.msk [vmem:[%s342] sm:$0xff] %vm370, %v1639
        %1642 = vst.msk [vmem:[%s342 + $0x8] sm:$0xff] %vm370, %v1640
        %s1643 = sand.u32 %s205, 1
        %s1644 = scalar_lea.sflag [#allocation4], %s1643
        %s1645 = sand.u32 %s205, 1
        %s1646 = smul.addr %s1645, 16
        %s1647 = scalar_lea.vmem [#allocation8], %s1646
        // Predicated region
        $region65: #{tpu_custom_call.1} parent=51 // pred_check
          %p1648 = pneg %p215
        $region66: #{tpu_custom_call.1} parent=51 // pred_check_branch
          %1650 = sbr.rel (%p1648) target = $region68
        $region67: #{tpu_custom_call.1} parent=51 // pred_region
          %s1652 = ssub.s32 256, 256
          %1653 = vsyncadd %s1644, %s1652
          %s1654 = smul.addr %s24, 2
          %s1655 = smul.addr %s1654, 128
          %s1656 = scalar_lea.hbm %s8, %s1655
          %s1657 = sshll.u32 %s1647, 4
          %s1658 = int_to_ptr.vmem [resolvable:$true] %s1657
          %1663 = dma.vmem_to_hbm [thread:$0]  %s1658, 256, %s1656, %s1644, 128, 128, 8
        $region68: #{tpu_custom_call.1} parent=51 // pred_fallthru
          _
      $region52: #{tpu_custom_call.1} parent=5 // pred_fallthru
        _
      %p1664 = scmp.le.s32.totalorder 2, %s19
      // Predicated region
      $region69: #{tpu_custom_call.1} parent=5 // pred_check
        %p1665 = pneg %p1664
      $region70: #{tpu_custom_call.1} parent=5 // pred_check_branch
        %1667 = sbr.rel (%p1665) target = $region72
      $region71: #{tpu_custom_call.1} parent=5 // pred_region
        %s1668 = ssub.s32 %s19, 2
        // Predicated region
        $region73: #{tpu_custom_call.1} parent=71 // pred_check
          %p1669 = pneg %p221
        $region74: #{tpu_custom_call.1} parent=71 // pred_check_branch
          %1671 = sbr.rel (%p1669) target = $region76
        $region75: #{tpu_custom_call.1} parent=71 // pred_region
          %s1672 = sand.u32 %s206, 1
          %s1673 = scalar_lea.sflag [#allocation4], %s1672
          %s1674 = sand.u32 %s206, 1
          %s1675 = smul.addr %s1674, 16
          %s1676 = scalar_lea.vmem [#allocation8], %s1675
          %1677 = dma.done %s1673, 256
        $region76: #{tpu_custom_call.1} parent=71 // pred_fallthru
          _
      $region72: #{tpu_custom_call.1} parent=5 // pred_fallthru
        _
    $region6: #{tpu_custom_call.1} parent=1 // loop_footer
      %s23 = sadd.s32 1, %s19
    $region7: #{tpu_custom_call.1} parent=1 // loop_footer_branch
      %18 = sbr.rel target = $region3
    $region8: #{tpu_custom_call.1} parent=1 // loop_exit
      _
    %1678 = vsyncpa [#allocation3], 1
    %s1679 = scalar_lea.sflag [#allocation3], 1
    %1680 = vsyncpa %s1679, 1
    %1681 = vsyncpa [#allocation6], 1
    %1682 = vsyncpa [#allocation4], 1
    %s1683 = scalar_lea.sflag [#allocation4], 1
    %1684 = vsyncpa %s1683, 1

</llo_original>
